<compile_context>
chip_gen: v7x
topology: tpu7x:2x2x1
jax: 0.10.0
libtpu: 0.0.40
codegen_flags: <defaults>
</compile_context>

<pallas_src>
import functools

import jax
import jax.numpy as jnp
from jax.experimental import pallas as pl
from jax.experimental.pallas import tpu as pltpu


def _round_up(x, m):
    return (x + m - 1) // m * m


# ---------------------------------------------------------------------------
# Pallas kernels
# ---------------------------------------------------------------------------
def _mm_kernel(*refs, relu, has_res):
    """Tiled MXU matmul, fp32 accumulation, fused per-column scale/shift
    (eval-mode BN), optional residual add and ReLU in the epilogue."""
    if has_res:
        a_ref, b_ref, s_ref, t_ref, r_ref, o_ref, acc_ref = refs
    else:
        a_ref, b_ref, s_ref, t_ref, o_ref, acc_ref = refs
        r_ref = None

    @pl.when(pl.program_id(2) == 0)
    def _():
        acc_ref[...] = jnp.zeros_like(acc_ref)

    acc_ref[...] += jnp.dot(a_ref[...], b_ref[...],
                            preferred_element_type=jnp.float32)

    @pl.when(pl.program_id(2) == pl.num_programs(2) - 1)
    def _():
        y = acc_ref[...] * s_ref[...] + t_ref[...]
        if has_res:
            y = y + r_ref[...].astype(jnp.float32)
        if relu:
            y = jnp.maximum(y, 0.0)
        o_ref[...] = y.astype(o_ref.dtype)


def _conv3s1_kernel(x0_ref, x1_ref, x2_ref, w_ref, s_ref, t_ref, o_ref,
                    acc_ref, *, Ho, Wo, Wp, cin, relu):
    """Direct stride-1 3x3x3 conv for one (batch, depth, Cout-tile) output
    plane.  kd is fully in-kernel; the three padded depth-planes arrive as
    three flattened (Hp*Wp, Cin) inputs.

    Each of the 27 taps is one whole-plane MXU dot:
        acc(Ho*Wp, tn) += plane[tap_row_offset : +Ho*Wp, :] @ w_tap(Cin, tn)
    The Wp-wide accumulator rows contain 2 "wrap" garbage columns per output
    row (wo in [Wo, Wp)); they are discarded when the epilogue writes the
    exact (Ho*Wo, tn) output block with the fused BN affine (+ ReLU).
    """
    planes = (x0_ref, x1_ref, x2_ref)
    Mp = Ho * Wp
    first = True
    for kdi in range(3):
        xr = planes[kdi]
        for j in range(3):
            for l in range(3):
                tap = kdi * 9 + j * 3 + l
                a = xr[j * Wp + l: j * Wp + l + Mp, :]          # (Mp, Cin)
                wk = w_ref[tap * cin:(tap + 1) * cin, :]        # (Cin, tn)
                c = jnp.dot(a, wk, preferred_element_type=jnp.float32)
                if first:
                    acc_ref[...] = c
                    first = False
                else:
                    acc_ref[...] += c

    s = s_ref[...]
    t = t_ref[...]
    for ho in range(Ho):
        y = acc_ref[ho * Wp: ho * Wp + Wo, :] * s + t
        if relu:
            y = jnp.maximum(y, 0.0)
        o_ref[ho * Wo:(ho + 1) * Wo, :] = y.astype(o_ref.dtype)


# ---------------------------------------------------------------------------
# Pallas wrappers
# ---------------------------------------------------------------------------
def _matmul_fused(a, b, scale, shift, *, relu, residual=None,
                  out_dtype=jnp.bfloat16):
    """(M,K)@(K,N) in bf16 on the MXU with f32 accumulation and a fused
    per-output-column scale/shift (+residual) (+ReLU) epilogue."""
    M, K = a.shape
    Kb, N = b.shape
    assert Kb == K

    a = a.astype(jnp.bfloat16)
    b = b.astype(jnp.bfloat16)

    def _pick(dim, cands):
        for c in cands:
            if dim % c == 0:
                return c
        return None

    # K: pad only to a multiple of 8 (bf16 sublane packing), prefer large
    # divisor tiles, else a single full-K block (no 128-padding).
    Kp = _round_up(K, 8)
    if Kp != K:
        a = jnp.pad(a, ((0, 0), (0, Kp - K)))
        b = jnp.pad(b, ((0, Kp - K), (0, 0)))
    tk = _pick(Kp, (512, 256, 128)) or Kp

    # N: large divisor tile (up to 512) or a full-dim block for small N.
    tn = _pick(N, (512, 256, 128)) or N

    # M: choose a divisor of M whenever possible -> no pad/slice round trip.
    Mp = _round_up(M, 8)
    tm_c = _pick(Mp, (512, 256, 128))
    if tm_c is not None and Mp == M:
        tm = tm_c
    elif Mp <= 1024:
        tm = Mp
    else:
        tm = 128
        Mp = _round_up(Mp, 128)
    if Mp != M:
        a = jnp.pad(a, ((0, Mp - M), (0, 0)))

    # v7x megacore: make sure at least 2 parallel grid tiles exist when the
    # shape allows it (late-stage layers otherwise run on one TensorCore).
    if (Mp // tm) * (N // tn) < 2:
        if tn % 2 == 0 and tn // 2 >= 128 and N % (tn // 2) == 0:
            tn //= 2
        elif tm % 2 == 0 and tm // 2 >= 128 and Mp % (tm // 2) == 0:
            tm //= 2

    s2 = scale.astype(jnp.float32).reshape(1, N)
    t2 = shift.astype(jnp.float32).reshape(1, N)

    has_res = residual is not None
    in_specs = [
        pl.BlockSpec((tm, tk), lambda i, j, k: (i, k)),
        pl.BlockSpec((tk, tn), lambda i, j, k: (k, j)),
        pl.BlockSpec((1, tn), lambda i, j, k: (0, j)),
        pl.BlockSpec((1, tn), lambda i, j, k: (0, j)),
    ]
    args = [a, b, s2, t2]
    if has_res:
        r = residual.astype(jnp.bfloat16)
        if Mp != M:
            r = jnp.pad(r, ((0, Mp - M), (0, 0)))
        in_specs.append(pl.BlockSpec((tm, tn), lambda i, j, k: (i, j)))
        args.append(r)

    out = pl.pallas_call(
        functools.partial(_mm_kernel, relu=relu, has_res=has_res),
        out_shape=jax.ShapeDtypeStruct((Mp, N), out_dtype),
        grid=(Mp // tm, N // tn, Kp // tk),
        in_specs=in_specs,
        out_specs=pl.BlockSpec((tm, tn), lambda i, j, k: (i, j)),
        scratch_shapes=[pltpu.VMEM((tm, tn), jnp.float32)],
        compiler_params=pltpu.CompilerParams(
            dimension_semantics=("parallel", "parallel", "arbitrary")),
    )(*args)
    if Mp != M:
        out = out[:M]
    return out


@functools.partial(jax.jit, static_argnames=("stride", "relu"))
def conv1x1_bn_act(x, w, scale, shift, *, stride=1, relu=True, residual=None):
    """1x1x1 Conv3d + eval-mode BN (+fused residual) (+ReLU).

    x: (N, D, H, W, Cin) channels-last; w: PyTorch (Cout, Cin, 1, 1, 1)."""
    if stride > 1:
        x = x[:, ::stride, ::stride, ::stride, :]
    N, D, H, W, Cin = x.shape
    Cout = w.shape[0]
    a = x.reshape(-1, Cin)
    b = w.reshape(Cout, Cin).T
    r = None if residual is None else residual.reshape(-1, Cout)
    out = _matmul_fused(a, b, scale, shift, relu=relu, residual=r)
    return out.reshape(N, D, H, W, Cout)


@functools.partial(jax.jit, static_argnames=("relu",))
def conv3x3s1_bn_act(x, w, scale, shift, *, relu=True):
    """3x3x3 stride-1 pad-1 Conv3d + eval-mode BN (+ReLU).

    Direct per-tap whole-plane MXU kernel; kd hoisted in-kernel so the
    weight block stays VMEM-resident across the (batch, depth) sweep.
    H is padded (1, 2): the extra bottom row is slack so the last whole-plane
    tap slice stays in bounds (it only feeds discarded wrap columns).
    """
    # TODO(synk): H/W halo is still materialised by one XLA pad in HBM; an
    # in-kernel VMEM halo would save one activation round trip per block.
    N, D, H, W, Cin = x.shape
    Cout = w.shape[0]
    Do, Ho, Wo = D, H, W
    Dp, Hp, Wp = D + 2, H + 3, W + 2
    xp = jnp.pad(x.astype(jnp.bfloat16),
                 ((0, 0), (1, 1), (1, 2), (1, 1), (0, 0)))
    xp = xp.reshape(N, Dp, Hp * Wp, Cin)          # flattened padded planes

    # (Cout, Cin, kd, kh, kw) -> (kd, kh, kw, Cin, Cout) -> (27*Cin, Cout);
    # row tap*Cin + ci with tap = kd*9 + kh*3 + kw (tap-major, Cin-minor —
    # matches the per-tap row slicing inside the kernel).
    wt = jnp.transpose(w.astype(jnp.bfloat16),
                       (2, 3, 4, 1, 0)).reshape(27 * Cin, Cout)

    tn = 128 if Cout % 128 == 0 else Cout          # keeps VMEM well under 16 MiB
    s2 = scale.astype(jnp.float32).reshape(1, Cout)
    t2 = shift.astype(jnp.float32).reshape(1, Cout)

    def x_spec(kdi):
        return pl.BlockSpec((None, None, Hp * Wp, Cin),
                            lambda j, n, d, kk=kdi: (n, d + kk, 0, 0))

    out = pl.pallas_call(
        functools.partial(_conv3s1_kernel, Ho=Ho, Wo=Wo, Wp=Wp, cin=Cin,
                          relu=relu),
        out_shape=jax.ShapeDtypeStruct((N, Do, Ho * Wo, Cout), jnp.bfloat16),
        grid=(Cout // tn, N, Do),                  # Cout tile outermost ->
        in_specs=[                                 # weights not re-DMA'd per plane
            x_spec(0), x_spec(1), x_spec(2),
            pl.BlockSpec((27 * Cin, tn), lambda j, n, d: (0, j)),
            pl.BlockSpec((1, tn), lambda j, n, d: (0, j)),
            pl.BlockSpec((1, tn), lambda j, n, d: (0, j)),
        ],
        out_specs=pl.BlockSpec((None, None, Ho * Wo, tn),
                               lambda j, n, d: (n, d, 0, j)),
        scratch_shapes=[pltpu.VMEM((Ho * Wp, tn), jnp.float32)],
        compiler_params=pltpu.CompilerParams(
            dimension_semantics=("arbitrary", "parallel", "parallel")),
    )(xp, xp, xp, wt, s2, t2)
    return out.reshape(N, Do, Ho, Wo, Cout)


@functools.partial(jax.jit, static_argnames=("stride", "pad", "relu"))
def conv3d_im2col_bn_act(x, w, scale, shift, *, stride, pad, relu):
    """General Conv3d via bf16 im2col + fused matmul.  Used only for the 7^3
    stride-2 stem and the three stride-2 3x3x3 convs."""
    # TODO(synk): a direct polyphase stride-2 kernel would remove the im2col
    # HBM expansion (largest relative win on v5e); kept for simplicity.
    N, D, H, W, Cin = x.shape
    Cout, _, kd, kh, kw = w.shape
    s = stride
    xp = jnp.pad(x.astype(jnp.bfloat16),
                 ((0, 0), (pad, pad), (pad, pad), (pad, pad), (0, 0)))
    Do = (D + 2 * pad - kd) // s + 1
    Ho = (H + 2 * pad - kh) // s + 1
    Wo = (W + 2 * pad - kw) // s + 1
    taps = []
    for i in range(kd):
        for j in range(kh):
            for l in range(kw):
                taps.append(
                    xp[:, i:i + s * Do:s, j:j + s * Ho:s, l:l + s * Wo:s, :])
    patches = jnp.stack(taps, axis=-1)          # (N,Do,Ho,Wo,Cin,kd*kh*kw)
    a = patches.reshape(N * Do * Ho * Wo, Cin * kd * kh * kw)
    b = w.reshape(Cout, Cin * kd * kh * kw).T
    out = _matmul_fused(a, b, scale, shift, relu=relu)
    return out.reshape(N, Do, Ho, Wo, Cout)


@jax.jit
def maxpool3d_k3_s2_p1(x):
    """MaxPool3d(kernel_size=3, stride=2, padding=1) on (N, D, H, W, C)."""
    # TODO(synk): kept as a fused XLA running-max over the 27 window taps.
    N, D, H, W, C = x.shape
    k, s, p = 3, 2, 1
    xp = jnp.pad(x, ((0, 0), (p, p), (p, p), (p, p), (0, 0)),
                 constant_values=-jnp.inf)
    Do = (D + 2 * p - k) // s + 1
    Ho = (H + 2 * p - k) // s + 1
    Wo = (W + 2 * p - k) // s + 1
    out = None
    for i in range(k):
        for j in range(k):
            for l in range(k):
                tap = xp[:, i:i + s * Do:s, j:j + s * Ho:s, l:l + s * Wo:s, :]
                out = tap if out is None else jnp.maximum(out, tap)
    return out


@jax.jit
def linear(x, w, bias):
    """nn.Linear: x @ w.T + bias via the Pallas matmul kernel (f32 logits)."""
    scale = jnp.ones((w.shape[0],), jnp.float32)
    return _matmul_fused(x, w.T, scale, bias, relu=False,
                         out_dtype=jnp.float32)


# ---------------------------------------------------------------------------
# Deterministic synthetic parameters for 3-D ResNet-50 (Bottleneck [3,4,6,3])
# ---------------------------------------------------------------------------
def _conv_init(key, cout, cin, k):
    fan_in = cin * k * k * k
    w = (jnp.sqrt(2.0 / fan_in) *
         jax.random.normal(key, (cout, cin, k, k, k), jnp.float32))
    return w.astype(jnp.bfloat16)            # cast weights to bf16 once


def _bn_init(key, c, eps=1e-5):
    k1, k2, k3 = jax.random.split(key, 3)
    gamma = 1.0 + 0.1 * jax.random.normal(k1, (c,), jnp.float32)
    beta = 0.1 * jax.random.normal(k2, (c,), jnp.float32)
    mean = 0.1 * jax.random.normal(k3, (c,), jnp.float32)
    var = jnp.ones((c,), jnp.float32)
    scale = gamma * jax.lax.rsqrt(var + eps)   # eval-mode BN folded to affine
    shift = beta - mean * scale
    return scale, shift


def init_lnm3d_params(key, num_classes=2, in_channels=1):
    """3-D ResNet-50, shortcut type 'B' (1x1x1 conv + BN downsample).
    Deterministic synthetic stand-in for resnet_50_23dataset.pth."""
    keys = iter(jax.random.split(key, 512))
    p = {
        "conv1_w": _conv_init(next(keys), 64, in_channels, 7),
        "bn1": _bn_init(next(keys), 64),
    }
    expansion = 4
    cfg = [(64, 3, 1), (128, 4, 2), (256, 6, 2), (512, 3, 2)]
    inplanes = 64
    layers = []
    for planes, nblocks, first_stride in cfg:
        blocks = []
        for bi in range(nblocks):
            stride = first_stride if bi == 0 else 1
            blk = {
                "stride": stride,
                "conv1_w": _conv_init(next(keys), planes, inplanes, 1),
                "bn1": _bn_init(next(keys), planes),
                "conv2_w": _conv_init(next(keys), planes, planes, 3),
                "bn2": _bn_init(next(keys), planes),
                "conv3_w": _conv_init(next(keys), planes * expansion, planes, 1),
                "bn3": _bn_init(next(keys), planes * expansion),
            }
            if stride != 1 or inplanes != planes * expansion:
                blk["ds_w"] = _conv_init(next(keys), planes * expansion,
                                         inplanes, 1)
                blk["ds_bn"] = _bn_init(next(keys), planes * expansion)
            blocks.append(blk)
            inplanes = planes * expansion
        layers.append(blocks)
    p["layers"] = layers
    p["fc_w"] = (0.02 * jax.random.normal(
        next(keys), (num_classes, 512 * expansion), jnp.float32)
    ).astype(jnp.bfloat16)
    p["fc_b"] = jnp.zeros((num_classes,), jnp.float32)
    return p


# ---------------------------------------------------------------------------
# Model forward
# ---------------------------------------------------------------------------
def _bottleneck(x, blk):
    s = blk["stride"]
    out = conv1x1_bn_act(x, blk["conv1_w"], *blk["bn1"], stride=1, relu=True)
    if s == 1:
        out = conv3x3s1_bn_act(out, blk["conv2_w"], *blk["bn2"], relu=True)
    else:
        out = conv3d_im2col_bn_act(out, blk["conv2_w"], *blk["bn2"],
                                   stride=s, pad=1, relu=True)
    if "ds_w" in blk:
        residual = conv1x1_bn_act(x, blk["ds_w"], *blk["ds_bn"],
                                  stride=s, relu=False)
    else:
        residual = x
    # conv3 with the residual add + ReLU fused into the matmul epilogue
    return conv1x1_bn_act(out, blk["conv3_w"], *blk["bn3"],
                          stride=1, relu=True, residual=residual)


def lnm3d_forward(params, x):
    """LNM3DModel.forward: 3-D ResNet-50 classifier.

    x: (N, C_in, D, H, W) float32 (PyTorch NCDHW) -> (N, num_classes) logits.
    """
    x = jnp.transpose(x, (0, 2, 3, 4, 1)).astype(jnp.bfloat16)  # NCDHW->NDHWC
    x = conv3d_im2col_bn_act(x, params["conv1_w"], *params["bn1"],
                             stride=2, pad=3, relu=True)
    x = maxpool3d_k3_s2_p1(x)
    for blocks in params["layers"]:
        for blk in blocks:
            x = _bottleneck(x, blk)
    # adaptive avg-pool to 1x1x1 — plain-JAX glue (spatial mean), f32
    x = jnp.mean(x.astype(jnp.float32), axis=(1, 2, 3))          # (N, 2048)
    return linear(x, params["fc_w"], params["fc_b"])


if __name__ == "__main__":
    root = jax.random.PRNGKey(0)
    pkey, xkey = jax.random.split(root)
    params = init_lnm3d_params(pkey, num_classes=2, in_channels=1)
    x = jax.random.normal(xkey, (2, 1, 16, 16, 16), jnp.float32)  # small NCDHW
    out = lnm3d_forward(params, x)
    out = jax.block_until_ready(out)
    assert out.shape == (2, 2) and out.dtype == jnp.float32
    assert bool(jnp.all(jnp.isfinite(out)))
    print("KERNEL_OK")
</pallas_src>

<mosaic_0001>
module attributes {stable_mosaic.version = 11 : i64} {
  func.func @_mm_kernel(%arg0: i32, %arg1: i32, %arg2: i32, %arg3: memref<512x344xbf16, #tpu.memory_space<vmem>>, %arg4: memref<344x64xbf16, #tpu.memory_space<vmem>>, %arg5: memref<1x64xf32, #tpu.memory_space<vmem>>, %arg6: memref<1x64xf32, #tpu.memory_space<vmem>>, %arg7: memref<512x64xbf16, #tpu.memory_space<vmem>>, %arg8: memref<512x64xf32, #tpu.memory_space<vmem>>) attributes {dimension_semantics = [#tpu.dimension_semantics<parallel>, #tpu.dimension_semantics<parallel>, #tpu.dimension_semantics<arbitrary>], iteration_bounds = array<i64: 2, 1, 1>, scalar_prefetch = 0 : i64, scratch_operands = 1 : i64, tpu.core_type = #tpu.core_type<tc>, window_params = [{transform_indices = @transform_0, window_bounds = array<i64: 512, 344>}, {transform_indices = @transform_1, window_bounds = array<i64: 344, 64>}, {transform_indices = @transform_2, window_bounds = array<i64: 1, 64>}, {transform_indices = @transform_3, window_bounds = array<i64: 1, 64>}, {transform_indices = @transform_4, window_bounds = array<i64: 512, 64>}]} {
    %c0_i32 = arith.constant 0 : i32
    %0 = arith.cmpi eq, %arg2, %c0_i32 : i32
    %1 = arith.extui %0 : i1 to i32
    %c0_i32_0 = arith.constant 0 : i32
    %2 = arith.cmpi ne, %1, %c0_i32_0 : i32
    scf.if %2 {
      %cst_10 = arith.constant 0.000000e+00 : f32
      %12 = vector.broadcast %cst_10 : f32 to vector<512x64xf32>
      %c0_11 = arith.constant 0 : index
      %c0_12 = arith.constant 0 : index
      %13 = vector.load %arg8[%c0_11, %c0_12] : memref<512x64xf32, #tpu.memory_space<vmem>>, vector<512x64xf32>
      tpu.vector_store %arg8[%c0_11, %c0_12], %12 {strides = array<i32>} : memref<512x64xf32, #tpu.memory_space<vmem>>, vector<512x64xf32>,
    } else {
    }
    %c0 = arith.constant 0 : index
    %c0_1 = arith.constant 0 : index
    %3 = vector.load %arg8[%c0, %c0_1] : memref<512x64xf32, #tpu.memory_space<vmem>>, vector<512x64xf32>
    %c0_2 = arith.constant 0 : index
    %c0_3 = arith.constant 0 : index
    %4 = vector.load %arg3[%c0_2, %c0_3] : memref<512x344xbf16, #tpu.memory_space<vmem>>, vector<512x344xbf16>
    %c0_4 = arith.constant 0 : index
    %c0_5 = arith.constant 0 : index
    %5 = vector.load %arg4[%c0_4, %c0_5] : memref<344x64xbf16, #tpu.memory_space<vmem>>, vector<344x64xbf16>
    %cst = arith.constant dense<0.000000e+00> : vector<512x64xf32>
    %6 = tpu.matmul %4, %5, %cst {dimension_numbers = #tpu.dot_dimension_numbers<[1], [0], [0], [1], [0, 0, 1, 1], [], []>} : vector<512x344xbf16>, vector<344x64xbf16>, vector<512x64xf32> -> vector<512x64xf32>
    %7 = arith.addf %3, %6 : vector<512x64xf32>
    %c0_6 = arith.constant 0 : index
    %c0_7 = arith.constant 0 : index
    %8 = vector.load %arg8[%c0_6, %c0_7] : memref<512x64xf32, #tpu.memory_space<vmem>>, vector<512x64xf32>
    tpu.vector_store %arg8[%c0_6, %c0_7], %7 {strides = array<i32>} : memref<512x64xf32, #tpu.memory_space<vmem>>, vector<512x64xf32>,
    %c0_i32_8 = arith.constant 0 : i32
    %9 = arith.cmpi eq, %arg2, %c0_i32_8 : i32
    %10 = arith.extui %9 : i1 to i32
    %c0_i32_9 = arith.constant 0 : i32
    %11 = arith.cmpi ne, %10, %c0_i32_9 : i32
    scf.if %11 {
      %c0_10 = arith.constant 0 : index
      %c0_11 = arith.constant 0 : index
      %12 = vector.load %arg8[%c0_10, %c0_11] : memref<512x64xf32, #tpu.memory_space<vmem>>, vector<512x64xf32>
      %c0_12 = arith.constant 0 : index
      %c0_13 = arith.constant 0 : index
      %13 = vector.load %arg5[%c0_12, %c0_13] : memref<1x64xf32, #tpu.memory_space<vmem>>, vector<1x64xf32>
      %14 = vector.broadcast %13 : vector<1x64xf32> to vector<512x64xf32>
      %15 = arith.mulf %12, %14 : vector<512x64xf32>
      %c0_14 = arith.constant 0 : index
      %c0_15 = arith.constant 0 : index
      %16 = vector.load %arg6[%c0_14, %c0_15] : memref<1x64xf32, #tpu.memory_space<vmem>>, vector<1x64xf32>
      %17 = vector.broadcast %16 : vector<1x64xf32> to vector<512x64xf32>
      %18 = arith.addf %15, %17 : vector<512x64xf32>
      %cst_16 = arith.constant 0.000000e+00 : f32
      %19 = vector.broadcast %cst_16 : f32 to vector<512x64xf32>
      %20 = arith.maximumf %18, %19 : vector<512x64xf32>
      %21 = arith.truncf %20 : vector<512x64xf32> to vector<512x64xbf16>
      %c0_17 = arith.constant 0 : index
      %c0_18 = arith.constant 0 : index
      %22 = vector.load %arg7[%c0_17, %c0_18] : memref<512x64xbf16, #tpu.memory_space<vmem>>, vector<512x64xbf16>
      tpu.vector_store %arg7[%c0_17, %c0_18], %21 {strides = array<i32>} : memref<512x64xbf16, #tpu.memory_space<vmem>>, vector<512x64xbf16>,
    } else {
    }
    return
  }
  func.func @transform_0(%arg0: i32, %arg1: i32, %arg2: i32) -> (i32, i32) {
    %c0_i32 = arith.constant 0 : i32
    return %arg0, %arg2 : i32, i32
  }
  func.func @transform_1(%arg0: i32, %arg1: i32, %arg2: i32) -> (i32, i32) {
    %c0_i32 = arith.constant 0 : i32
    return %arg2, %arg1 : i32, i32
  }
  func.func @transform_2(%arg0: i32, %arg1: i32, %arg2: i32) -> (i32, i32) {
    %c0_i32 = arith.constant 0 : i32
    %c0_i32_0 = arith.constant 0 : i32
    return %c0_i32, %arg1 : i32, i32
  }
  func.func @transform_3(%arg0: i32, %arg1: i32, %arg2: i32) -> (i32, i32) {
    %c0_i32 = arith.constant 0 : i32
    %c0_i32_0 = arith.constant 0 : i32
    return %c0_i32, %arg1 : i32, i32
  }
  func.func @transform_4(%arg0: i32, %arg1: i32, %arg2: i32) -> (i32, i32) {
    %c0_i32 = arith.constant 0 : i32
    return %arg0, %arg1 : i32, i32
  }
}

</mosaic_0001>

<llo_original>
// kernel: conv3d_im2col_bn_act.1
$region0: #{conv3d_im2col_bn_act.1}
  #allocation0 [shape = 'u32[]', space=smem, size = 0x4, offset = 0x4, fixed_abs, tag = 'smem constant byte address 0x4 - core index']
  #allocation1 [shape = 'u32[144,128]{1,0:T(1,128)}', space=vmem, size = 0x12000, scoped, tag = 'internal scratch']
  #allocation2 [shape = 'f32[512,64]{1,0:T(8,128)}', space=vmem, size = 0x40000, scoped, tag = 'scratch operand']
  %s0 = inlined_call_operand.vmem [shape: bf16[1024,344], index: 0, kind: input, shape index: {}]
  %s1 = inlined_call_operand.vmem [shape: bf16[344,64], index: 1, kind: input, shape index: {}]
  %s2 = inlined_call_operand.vmem [shape: f32[1,64], index: 2, kind: input, shape index: {}]
  %s3 = inlined_call_operand.vmem [shape: f32[1,64], index: 3, kind: input, shape index: {}]
  %s4 = inlined_call_operand.hbm [shape: bf16[1024,64], index: 4, kind: output, shape index: {}]
  %s5 = sld [smem:[#allocation0]]
  $region57: #{conv3d_im2col_bn_act.1} parent=0
    _
  %s7 = ssub.s32 1, %s5
  %s8 = scalar_select 0, %s7, %s5
  $region1: #{conv3d_im2col_bn_act.1} parent=0
    #allocation3 [shape = 'u8[262144]{0}', space=vmem, size = 0x40000, scoped, tag = 'output window, operand 0']
    #allocation4 [shape = 's32[2]{0}', space=sflag, size = 0x8, scoped, tag = 'scoped memory for conv3d_im2col_bn_act.1']
    %9 = vsyncpa [#allocation4], 0
    %s10 = scalar_lea.sflag [#allocation4], 1
    %11 = vsyncpa %s10, 0
    loop: start=0, step=1, limit=4
    $region2: #{conv3d_im2col_bn_act.1} parent=1 // loop_pre_header
      _
    $region3: #{conv3d_im2col_bn_act.1} parent=1 // loop_header
      %s13 = sphi 0, %s17
      %p14 = scmp.ge.s32.totalorder %s13, 4
      %s20 = sphi 0, %s39
      %s21 = sphi 0, %s35
      %s22 = sphi 0, %s31
      %s23 = sphi 0, %s20
      %s24 = sphi 0, %s21
      %s25 = sphi 0, %s22
      %s26 = sphi 0, %s23
      %s27 = sphi 0, %s24
      %s28 = sphi 0, %s25
      %s44 = sphi 0, %s46
      %s47 = sphi 0, %s44
      %s48 = sphi 0, %s47
      %s64 = sphi 0, %s48
      %s72 = sphi 0, %s74
      %s75 = sphi 0, %s72
      %s76 = sphi 0, %s75
      %s92 = sphi 0, %s76
      %s98 = sphi 0, %s100
      %s101 = sphi 0, %s98
      %s102 = sphi 0, %s101
      %s118 = sphi 0, %s102
      %s124 = sphi 0, %s126
      %s127 = sphi 0, %s124
      %s128 = sphi 0, %s127
      %s144 = sphi 0, %s128
      %s152 = sphi 0, %s154
      %s155 = sphi 0, %s152
      %s156 = sphi 0, %s155
      %s172 = sphi 0, %s156
    $region4: #{conv3d_im2col_bn_act.1} parent=1 // loop_header_branch
      %16 = sbr.rel (%p14) target = $region8
    $region5: #{conv3d_im2col_bn_act.1} parent=1 // loop_body
      %s18 = ssub.s32 %s13, 1
      %s19 = ssub.s32 %s13, 2
      %s29 = sadd.s32 1, %s22
      %p30 = scmp.ge.s32.totalorder %s29, 1
      %s31 = scalar_select %p30, 0, %s29
      %s32 = sadd.s32 1, %s21
      %s33 = scalar_select %p30, %s32, %s21
      %p34 = scmp.ge.s32.totalorder %s33, 1
      %s35 = scalar_select %p34, 0, %s33
      %s36 = sadd.s32 1, %s20
      %s37 = scalar_select %p34, %s36, %s20
      %p38 = scmp.ge.s32.totalorder %s37, 2
      %s39 = scalar_select %p38, 0, %s37
      %s40 = ssub.s32 %s20, %s39
      %s41 = ssub.s32 %s22, %s31
      %s42 = sor.u32 %s40, %s41
      %p43 = scmp.eq.s32.totalorder %s42, 0
      %s45 = sadd.s32 %s44, 1
      %s46 = scalar_select %p43, %s44, %s45
      %p49 = pneg %p43
      %p50 = scmp.eq.s32.totalorder %s13, 1
      %p51 = por %p49, %p50
      %p52 = scmp.ne.s32.totalorder %s44, %s47
      %p53 = scmp.eq.s32.totalorder %s13, 0
      %p54 = por %p52, %p53
      %p55 = scmp.ne.s32.totalorder %s44, %s47
      %p56 = scmp.eq.s32.totalorder %s18, 1
      %p57 = por %p55, %p56
      %p58 = scmp.ne.s32.totalorder %s47, %s48
      %p59 = scmp.eq.s32.totalorder %s18, 0
      %p60 = por %p58, %p59
      %p61 = scmp.ne.s32.totalorder %s47, %s48
      %p62 = scmp.eq.s32.totalorder %s19, 1
      %p63 = por %p61, %p62
      %p65 = scmp.ne.s32.totalorder %s48, %s64
      %p66 = scmp.eq.s32.totalorder %s19, 0
      %p67 = por %p65, %p66
      %s68 = ssub.s32 %s22, %s31
      %s69 = ssub.s32 %s21, %s35
      %s70 = sor.u32 %s68, %s69
      %p71 = scmp.eq.s32.totalorder %s70, 0
      %s73 = sadd.s32 %s72, 1
      %s74 = scalar_select %p71, %s72, %s73
      %p77 = pneg %p71
      %p78 = scmp.eq.s32.totalorder %s13, 1
      %p79 = por %p77, %p78
      %p80 = scmp.ne.s32.totalorder %s72, %s75
      %p81 = scmp.eq.s32.totalorder %s13, 0
      %p82 = por %p80, %p81
      %p83 = scmp.ne.s32.totalorder %s72, %s75
      %p84 = scmp.eq.s32.totalorder %s18, 1
      %p85 = por %p83, %p84
      %p86 = scmp.ne.s32.totalorder %s75, %s76
      %p87 = scmp.eq.s32.totalorder %s18, 0
      %p88 = por %p86, %p87
      %p89 = scmp.ne.s32.totalorder %s75, %s76
      %p90 = scmp.eq.s32.totalorder %s19, 1
      %p91 = por %p89, %p90
      %p93 = scmp.ne.s32.totalorder %s76, %s92
      %p94 = scmp.eq.s32.totalorder %s19, 0
      %p95 = por %p93, %p94
      %s96 = ssub.s32 %s21, %s35
      %p97 = scmp.eq.s32.totalorder %s96, 0
      %s99 = sadd.s32 %s98, 1
      %s100 = scalar_select %p97, %s98, %s99
      %p103 = pneg %p97
      %p104 = scmp.eq.s32.totalorder %s13, 1
      %p105 = por %p103, %p104
      %p106 = scmp.ne.s32.totalorder %s98, %s101
      %p107 = scmp.eq.s32.totalorder %s13, 0
      %p108 = por %p106, %p107
      %p109 = scmp.ne.s32.totalorder %s98, %s101
      %p110 = scmp.eq.s32.totalorder %s18, 1
      %p111 = por %p109, %p110
      %p112 = scmp.ne.s32.totalorder %s101, %s102
      %p113 = scmp.eq.s32.totalorder %s18, 0
      %p114 = por %p112, %p113
      %p115 = scmp.ne.s32.totalorder %s101, %s102
      %p116 = scmp.eq.s32.totalorder %s19, 1
      %p117 = por %p115, %p116
      %p119 = scmp.ne.s32.totalorder %s102, %s118
      %p120 = scmp.eq.s32.totalorder %s19, 0
      %p121 = por %p119, %p120
      %s122 = ssub.s32 %s21, %s35
      %p123 = scmp.eq.s32.totalorder %s122, 0
      %s125 = sadd.s32 %s124, 1
      %s126 = scalar_select %p123, %s124, %s125
      %p129 = pneg %p123
      %p130 = scmp.eq.s32.totalorder %s13, 1
      %p131 = por %p129, %p130
      %p132 = scmp.ne.s32.totalorder %s124, %s127
      %p133 = scmp.eq.s32.totalorder %s13, 0
      %p134 = por %p132, %p133
      %p135 = scmp.ne.s32.totalorder %s124, %s127
      %p136 = scmp.eq.s32.totalorder %s18, 1
      %p137 = por %p135, %p136
      %p138 = scmp.ne.s32.totalorder %s127, %s128
      %p139 = scmp.eq.s32.totalorder %s18, 0
      %p140 = por %p138, %p139
      %p141 = scmp.ne.s32.totalorder %s127, %s128
      %p142 = scmp.eq.s32.totalorder %s19, 1
      %p143 = por %p141, %p142
      %p145 = scmp.ne.s32.totalorder %s128, %s144
      %p146 = scmp.eq.s32.totalorder %s19, 0
      %p147 = por %p145, %p146
      %s148 = ssub.s32 %s20, %s39
      %s149 = ssub.s32 %s21, %s35
      %s150 = sor.u32 %s148, %s149
      %p151 = scmp.eq.s32.totalorder %s150, 0
      %s153 = sadd.s32 %s152, 1
      %s154 = scalar_select %p151, %s152, %s153
      %p157 = pneg %p151
      %p158 = scmp.eq.s32.totalorder %s13, 1
      %p159 = por %p157, %p158
      %p160 = scmp.ne.s32.totalorder %s152, %s155
      %p161 = scmp.eq.s32.totalorder %s13, 0
      %p162 = por %p160, %p161
      %p163 = scmp.ne.s32.totalorder %s152, %s155
      %p164 = scmp.eq.s32.totalorder %s18, 1
      %p165 = por %p163, %p164
      %p166 = scmp.ne.s32.totalorder %s155, %s156
      %p167 = scmp.eq.s32.totalorder %s18, 0
      %p168 = por %p166, %p167
      %p169 = scmp.ne.s32.totalorder %s155, %s156
      %p170 = scmp.eq.s32.totalorder %s19, 1
      %p171 = por %p169, %p170
      %p173 = scmp.ne.s32.totalorder %s156, %s172
      %p174 = scmp.eq.s32.totalorder %s19, 0
      %p175 = por %p173, %p174
      %p176 = scmp.le.s32.totalorder 1, %s13
      %p177 = scmp.lt.s32.totalorder %s13, 3
      %p178 = pnand %p176, %p177
      %p179 = pneg %p178
      // Predicated region
      $region9: #{conv3d_im2col_bn_act.1} parent=5 // pred_check
        _
      $region10: #{conv3d_im2col_bn_act.1} parent=5 // pred_check_branch
        %181 = sbr.rel (%p178) target = $region12
      $region11: #{conv3d_im2col_bn_act.1} parent=5 // pred_region
        %s182 = ssub.s32 %s13, 1
        // Predicated region
        $region13: #{conv3d_im2col_bn_act.1} parent=11 // pred_check
          %p183 = pneg %p88
        $region14: #{conv3d_im2col_bn_act.1} parent=11 // pred_check_branch
          %185 = sbr.rel (%p183) target = $region16
        $region15: #{conv3d_im2col_bn_act.1} parent=11 // pred_region
          %s186 = smul.u32 43, %s25
          %p187 = scmp.lt.s32.totalorder %s186, 42
          %s188 = scalar_select %p187, %s186, 42
          %p189 = scmp.lt.s32.totalorder %s24, 0
          %s190 = scalar_select %p189, %s24, 0
          %s191 = sadd.s32 %s190, %s188
          %s192 = smul.addr %s191, 4
          %s193 = scalar_lea.vmem %s1, %s192
          %s194 = smul.u32 43, %s25
        $region16: #{conv3d_im2col_bn_act.1} parent=11 // pred_fallthru
          _
        // Predicated region
        $region17: #{conv3d_im2col_bn_act.1} parent=11 // pred_check
          %p195 = pneg %p114
        $region18: #{conv3d_im2col_bn_act.1} parent=11 // pred_check_branch
          %197 = sbr.rel (%p195) target = $region20
        $region19: #{conv3d_im2col_bn_act.1} parent=11 // pred_region
          %p198 = scmp.lt.s32.totalorder %s24, 0
          %s199 = scalar_select %p198, %s24, 0
          %s200 = scalar_lea.vmem %s2, %s199
        $region20: #{conv3d_im2col_bn_act.1} parent=11 // pred_fallthru
          _
        // Predicated region
        $region21: #{conv3d_im2col_bn_act.1} parent=11 // pred_check
          %p201 = pneg %p140
        $region22: #{conv3d_im2col_bn_act.1} parent=11 // pred_check_branch
          %203 = sbr.rel (%p201) target = $region24
        $region23: #{conv3d_im2col_bn_act.1} parent=11 // pred_region
          %p204 = scmp.lt.s32.totalorder %s24, 0
          %s205 = scalar_select %p204, %s24, 0
          %s206 = scalar_lea.vmem %s3, %s205
        $region24: #{conv3d_im2col_bn_act.1} parent=11 // pred_fallthru
          _
      $region12: #{conv3d_im2col_bn_act.1} parent=5 // pred_fallthru
        _
      %p207 = scmp.lt.s32.totalorder %s13, 2
      // Predicated region
      $region25: #{conv3d_im2col_bn_act.1} parent=5 // pred_check
        %p208 = pneg %p207
      $region26: #{conv3d_im2col_bn_act.1} parent=5 // pred_check_branch
        %210 = sbr.rel (%p208) target = $region28
      $region27: #{conv3d_im2col_bn_act.1} parent=5 // pred_region
        // Predicated region
        $region29: #{conv3d_im2col_bn_act.1} parent=27 // pred_check
          %p211 = pneg %p54
        $region30: #{conv3d_im2col_bn_act.1} parent=27 // pred_check_branch
          %213 = sbr.rel (%p211) target = $region32
        $region31: #{conv3d_im2col_bn_act.1} parent=27 // pred_region
          %s214 = smul.u32 64, %s20
          %s215 = smul.u32 3, %s22
          %p216 = scmp.lt.s32.totalorder %s214, 127
          %s217 = scalar_select %p216, %s214, 127
          %p218 = scmp.lt.s32.totalorder %s215, 2
          %s219 = scalar_select %p218, %s215, 2
          %s220 = smul.addr %s217, 3
          %s221 = sadd.s32 %s219, %s220
          %s222 = smul.addr %s221, 4
          %s223 = scalar_lea.vmem %s0, %s222
          %s224 = smul.u32 64, %s20
          %s225 = smul.u32 3, %s22
        $region32: #{conv3d_im2col_bn_act.1} parent=27 // pred_fallthru
          _
      $region28: #{conv3d_im2col_bn_act.1} parent=5 // pred_fallthru
        _
      %p226 = scmp.le.s32.totalorder 1, %s13
      %p227 = scmp.lt.s32.totalorder %s13, 3
      %p228 = pnand %p226, %p227
      %p229 = pneg %p228
      // Predicated region
      $region33: #{conv3d_im2col_bn_act.1} parent=5 // pred_check
        _
      $region34: #{conv3d_im2col_bn_act.1} parent=5 // pred_check_branch
        %231 = sbr.rel (%p228) target = $region36
      $region35: #{conv3d_im2col_bn_act.1} parent=5 // pred_region
        %s232 = ssub.s32 %s13, 1
        %s233 = smul.u32 64, %s23
        %s234 = smul.u32 3, %s25
        %p235 = scmp.lt.s32.totalorder %s233, 127
        %s236 = scalar_select %p235, %s233, 127
        %p237 = scmp.lt.s32.totalorder %s234, 2
        %s238 = scalar_select %p237, %s234, 2
        %s239 = smul.addr %s236, 3
        %s240 = sadd.s32 %s238, %s239
        %s241 = smul.addr %s240, 4
        %s242 = scalar_lea.vmem %s0, %s241
        %p243 = pneg %p60
        %p244 = pneg %p57
        %s245 = smul.u32 43, %s25
        %p246 = scmp.lt.s32.totalorder %s245, 42
        %s247 = scalar_select %p246, %s245, 42
        %p248 = scmp.lt.s32.totalorder %s24, 0
        %s249 = scalar_select %p248, %s24, 0
        %s250 = sadd.s32 %s249, %s247
        %s251 = smul.addr %s250, 4
        %s252 = scalar_lea.vmem %s1, %s251
        %p253 = pneg %p88
        %p254 = pneg %p85
        %p255 = scmp.lt.s32.totalorder %s24, 0
        %s256 = scalar_select %p255, %s24, 0
        %s257 = scalar_lea.vmem %s2, %s256
        %p258 = pneg %p114
        %p259 = pneg %p111
        %p260 = scmp.lt.s32.totalorder %s24, 0
        %s261 = scalar_select %p260, %s24, 0
        %s262 = scalar_lea.vmem %s3, %s261
        %p263 = pneg %p140
        %p264 = pneg %p137
        %p265 = pneg %p168
        %p266 = pneg %p165
        %s267 = sand.u32 %s155, 1
        %s268 = scalar_lea.sflag [#allocation4], %s267
        %s269 = sand.u32 %s155, 1
        %s270 = smul.addr %s269, 256
        %s271 = scalar_lea.vmem [#allocation3], %s270
        %s272 = smul.u32 64, %s23
        %s273 = smul.u32 3, %s25
        %p274 = scmp.lt.s32.totalorder %s272, 127
        %s275 = scalar_select %p274, %s272, 127
        %p276 = scmp.lt.s32.totalorder %s273, 2
        %s277 = scalar_select %p276, %s273, 2
        %s278 = smul.addr %s275, 3
        %s279 = sadd.s32 %s277, %s278
        %s280 = smul.addr %s279, 4
        %s281 = scalar_lea.vmem %s0, %s280
        %s282 = smul.u32 64, %s23
        %s283 = smul.u32 3, %s25
        %s284 = smul.u32 43, %s25
        %p285 = scmp.lt.s32.totalorder %s284, 42
        %s286 = scalar_select %p285, %s284, 42
        %p287 = scmp.lt.s32.totalorder %s24, 0
        %s288 = scalar_select %p287, %s24, 0
        %s289 = sadd.s32 %s288, %s286
        %s290 = smul.addr %s289, 4
        %s291 = scalar_lea.vmem %s1, %s290
        %s292 = smul.u32 43, %s25
        %p293 = scmp.lt.s32.totalorder %s24, 0
        %s294 = scalar_select %p293, %s24, 0
        %s295 = scalar_lea.vmem %s2, %s294
        %p296 = scmp.lt.s32.totalorder %s24, 0
        %s297 = scalar_select %p296, %s24, 0
        %s298 = scalar_lea.vmem %s3, %s297
        %s299 = smul.u32 64, %s23
        %p301 = scmp.eq.s32.totalorder %s25, 0
        // Predicated region
        $region37: #{conv3d_im2col_bn_act.1} parent=35 // pred_check
          %p302 = pneg %p301
        $region38: #{conv3d_im2col_bn_act.1} parent=35 // pred_check_branch
          %304 = sbr.rel (%p302) target = $region40
        $region39: #{conv3d_im2col_bn_act.1} parent=35 // pred_region
          %vm305 = vcmask 523264
          %306 = vst.msk [vmem:[#allocation2] sm:$0xff] %vm305, 0.0
          %307 = vst.msk [vmem:[#allocation2 + $0x8] sm:$0xff] %vm305, 0.0
          %308 = vst.msk [vmem:[#allocation2 + $0x10] sm:$0xff] %vm305, 0.0
          %309 = vst.msk [vmem:[#allocation2 + $0x18] sm:$0xff] %vm305, 0.0
          %310 = vst.msk [vmem:[#allocation2 + $0x20] sm:$0xff] %vm305, 0.0
          %311 = vst.msk [vmem:[#allocation2 + $0x28] sm:$0xff] %vm305, 0.0
          %312 = vst.msk [vmem:[#allocation2 + $0x30] sm:$0xff] %vm305, 0.0
          %313 = vst.msk [vmem:[#allocation2 + $0x38] sm:$0xff] %vm305, 0.0
          %314 = vst.msk [vmem:[#allocation2 + $0x40] sm:$0xff] %vm305, 0.0
          %315 = vst.msk [vmem:[#allocation2 + $0x48] sm:$0xff] %vm305, 0.0
          %316 = vst.msk [vmem:[#allocation2 + $0x50] sm:$0xff] %vm305, 0.0
          %317 = vst.msk [vmem:[#allocation2 + $0x58] sm:$0xff] %vm305, 0.0
          %318 = vst.msk [vmem:[#allocation2 + $0x60] sm:$0xff] %vm305, 0.0
          %319 = vst.msk [vmem:[#allocation2 + $0x68] sm:$0xff] %vm305, 0.0
          %320 = vst.msk [vmem:[#allocation2 + $0x70] sm:$0xff] %vm305, 0.0
          %321 = vst.msk [vmem:[#allocation2 + $0x78] sm:$0xff] %vm305, 0.0
          %322 = vst.msk [vmem:[#allocation2 + $0x80] sm:$0xff] %vm305, 0.0
          %323 = vst.msk [vmem:[#allocation2 + $0x88] sm:$0xff] %vm305, 0.0
          %324 = vst.msk [vmem:[#allocation2 + $0x90] sm:$0xff] %vm305, 0.0
          %325 = vst.msk [vmem:[#allocation2 + $0x98] sm:$0xff] %vm305, 0.0
          %326 = vst.msk [vmem:[#allocation2 + $0xa0] sm:$0xff] %vm305, 0.0
          %327 = vst.msk [vmem:[#allocation2 + $0xa8] sm:$0xff] %vm305, 0.0
          %328 = vst.msk [vmem:[#allocation2 + $0xb0] sm:$0xff] %vm305, 0.0
          %329 = vst.msk [vmem:[#allocation2 + $0xb8] sm:$0xff] %vm305, 0.0
          %330 = vst.msk [vmem:[#allocation2 + $0xc0] sm:$0xff] %vm305, 0.0
          %331 = vst.msk [vmem:[#allocation2 + $0xc8] sm:$0xff] %vm305, 0.0
          %332 = vst.msk [vmem:[#allocation2 + $0xd0] sm:$0xff] %vm305, 0.0
          %333 = vst.msk [vmem:[#allocation2 + $0xd8] sm:$0xff] %vm305, 0.0
          %334 = vst.msk [vmem:[#allocation2 + $0xe0] sm:$0xff] %vm305, 0.0
          %335 = vst.msk [vmem:[#allocation2 + $0xe8] sm:$0xff] %vm305, 0.0
          %336 = vst.msk [vmem:[#allocation2 + $0xf0] sm:$0xff] %vm305, 0.0
          %337 = vst.msk [vmem:[#allocation2 + $0xf8] sm:$0xff] %vm305, 0.0
          %338 = vst.msk [vmem:[#allocation2 + $0x100] sm:$0xff] %vm305, 0.0
          %339 = vst.msk [vmem:[#allocation2 + $0x108] sm:$0xff] %vm305, 0.0
          %340 = vst.msk [vmem:[#allocation2 + $0x110] sm:$0xff] %vm305, 0.0
          %341 = vst.msk [vmem:[#allocation2 + $0x118] sm:$0xff] %vm305, 0.0
          %342 = vst.msk [vmem:[#allocation2 + $0x120] sm:$0xff] %vm305, 0.0
          %343 = vst.msk [vmem:[#allocation2 + $0x128] sm:$0xff] %vm305, 0.0
          %344 = vst.msk [vmem:[#allocation2 + $0x130] sm:$0xff] %vm305, 0.0
          %345 = vst.msk [vmem:[#allocation2 + $0x138] sm:$0xff] %vm305, 0.0
          %346 = vst.msk [vmem:[#allocation2 + $0x140] sm:$0xff] %vm305, 0.0
          %347 = vst.msk [vmem:[#allocation2 + $0x148] sm:$0xff] %vm305, 0.0
          %348 = vst.msk [vmem:[#allocation2 + $0x150] sm:$0xff] %vm305, 0.0
          %349 = vst.msk [vmem:[#allocation2 + $0x158] sm:$0xff] %vm305, 0.0
          %350 = vst.msk [vmem:[#allocation2 + $0x160] sm:$0xff] %vm305, 0.0
          %351 = vst.msk [vmem:[#allocation2 + $0x168] sm:$0xff] %vm305, 0.0
          %352 = vst.msk [vmem:[#allocation2 + $0x170] sm:$0xff] %vm305, 0.0
          %353 = vst.msk [vmem:[#allocation2 + $0x178] sm:$0xff] %vm305, 0.0
          %354 = vst.msk [vmem:[#allocation2 + $0x180] sm:$0xff] %vm305, 0.0
          %355 = vst.msk [vmem:[#allocation2 + $0x188] sm:$0xff] %vm305, 0.0
          %356 = vst.msk [vmem:[#allocation2 + $0x190] sm:$0xff] %vm305, 0.0
          %357 = vst.msk [vmem:[#allocation2 + $0x198] sm:$0xff] %vm305, 0.0
          %358 = vst.msk [vmem:[#allocation2 + $0x1a0] sm:$0xff] %vm305, 0.0
          %359 = vst.msk [vmem:[#allocation2 + $0x1a8] sm:$0xff] %vm305, 0.0
          %360 = vst.msk [vmem:[#allocation2 + $0x1b0] sm:$0xff] %vm305, 0.0
          %361 = vst.msk [vmem:[#allocation2 + $0x1b8] sm:$0xff] %vm305, 0.0
          %362 = vst.msk [vmem:[#allocation2 + $0x1c0] sm:$0xff] %vm305, 0.0
          %363 = vst.msk [vmem:[#allocation2 + $0x1c8] sm:$0xff] %vm305, 0.0
          %364 = vst.msk [vmem:[#allocation2 + $0x1d0] sm:$0xff] %vm305, 0.0
          %365 = vst.msk [vmem:[#allocation2 + $0x1d8] sm:$0xff] %vm305, 0.0
          %366 = vst.msk [vmem:[#allocation2 + $0x1e0] sm:$0xff] %vm305, 0.0
          %367 = vst.msk [vmem:[#allocation2 + $0x1e8] sm:$0xff] %vm305, 0.0
          %368 = vst.msk [vmem:[#allocation2 + $0x1f0] sm:$0xff] %vm305, 0.0
          %369 = vst.msk [vmem:[#allocation2 + $0x1f8] sm:$0xff] %vm305, 0.0
        $region40: #{conv3d_im2col_bn_act.1} parent=35 // pred_fallthru
          _
        %v370 = vld [vmem:[#allocation2] sm:$0xff]
        %v371 = vld [vmem:[#allocation2 + $0x8] sm:$0xff]
        %v372 = vld [vmem:[#allocation2 + $0x10] sm:$0xff]
        %v373 = vld [vmem:[#allocation2 + $0x18] sm:$0xff]
        %v374 = vld [vmem:[#allocation2 + $0x20] sm:$0xff]
        %v375 = vld [vmem:[#allocation2 + $0x28] sm:$0xff]
        %v376 = vld [vmem:[#allocation2 + $0x30] sm:$0xff]
        %v377 = vld [vmem:[#allocation2 + $0x38] sm:$0xff]
        %v378 = vld [vmem:[#allocation2 + $0x40] sm:$0xff]
        %v379 = vld [vmem:[#allocation2 + $0x48] sm:$0xff]
        %v380 = vld [vmem:[#allocation2 + $0x50] sm:$0xff]
        %v381 = vld [vmem:[#allocation2 + $0x58] sm:$0xff]
        %v382 = vld [vmem:[#allocation2 + $0x60] sm:$0xff]
        %v383 = vld [vmem:[#allocation2 + $0x68] sm:$0xff]
        %v384 = vld [vmem:[#allocation2 + $0x70] sm:$0xff]
        %v385 = vld [vmem:[#allocation2 + $0x78] sm:$0xff]
        %v386 = vld [vmem:[#allocation2 + $0x80] sm:$0xff]
        %v387 = vld [vmem:[#allocation2 + $0x88] sm:$0xff]
        %v388 = vld [vmem:[#allocation2 + $0x90] sm:$0xff]
        %v389 = vld [vmem:[#allocation2 + $0x98] sm:$0xff]
        %v390 = vld [vmem:[#allocation2 + $0xa0] sm:$0xff]
        %v391 = vld [vmem:[#allocation2 + $0xa8] sm:$0xff]
        %v392 = vld [vmem:[#allocation2 + $0xb0] sm:$0xff]
        %v393 = vld [vmem:[#allocation2 + $0xb8] sm:$0xff]
        %v394 = vld [vmem:[#allocation2 + $0xc0] sm:$0xff]
        %v395 = vld [vmem:[#allocation2 + $0xc8] sm:$0xff]
        %v396 = vld [vmem:[#allocation2 + $0xd0] sm:$0xff]
        %v397 = vld [vmem:[#allocation2 + $0xd8] sm:$0xff]
        %v398 = vld [vmem:[#allocation2 + $0xe0] sm:$0xff]
        %v399 = vld [vmem:[#allocation2 + $0xe8] sm:$0xff]
        %v400 = vld [vmem:[#allocation2 + $0xf0] sm:$0xff]
        %v401 = vld [vmem:[#allocation2 + $0xf8] sm:$0xff]
        %v402 = vld [vmem:[#allocation2 + $0x100] sm:$0xff]
        %v403 = vld [vmem:[#allocation2 + $0x108] sm:$0xff]
        %v404 = vld [vmem:[#allocation2 + $0x110] sm:$0xff]
        %v405 = vld [vmem:[#allocation2 + $0x118] sm:$0xff]
        %v406 = vld [vmem:[#allocation2 + $0x120] sm:$0xff]
        %v407 = vld [vmem:[#allocation2 + $0x128] sm:$0xff]
        %v408 = vld [vmem:[#allocation2 + $0x130] sm:$0xff]
        %v409 = vld [vmem:[#allocation2 + $0x138] sm:$0xff]
        %v410 = vld [vmem:[#allocation2 + $0x140] sm:$0xff]
        %v411 = vld [vmem:[#allocation2 + $0x148] sm:$0xff]
        %v412 = vld [vmem:[#allocation2 + $0x150] sm:$0xff]
        %v413 = vld [vmem:[#allocation2 + $0x158] sm:$0xff]
        %v414 = vld [vmem:[#allocation2 + $0x160] sm:$0xff]
        %v415 = vld [vmem:[#allocation2 + $0x168] sm:$0xff]
        %v416 = vld [vmem:[#allocation2 + $0x170] sm:$0xff]
        %v417 = vld [vmem:[#allocation2 + $0x178] sm:$0xff]
        %v418 = vld [vmem:[#allocation2 + $0x180] sm:$0xff]
        %v419 = vld [vmem:[#allocation2 + $0x188] sm:$0xff]
        %v420 = vld [vmem:[#allocation2 + $0x190] sm:$0xff]
        %v421 = vld [vmem:[#allocation2 + $0x198] sm:$0xff]
        %v422 = vld [vmem:[#allocation2 + $0x1a0] sm:$0xff]
        %v423 = vld [vmem:[#allocation2 + $0x1a8] sm:$0xff]
        %v424 = vld [vmem:[#allocation2 + $0x1b0] sm:$0xff]
        %v425 = vld [vmem:[#allocation2 + $0x1b8] sm:$0xff]
        %v426 = vld [vmem:[#allocation2 + $0x1c0] sm:$0xff]
        %v427 = vld [vmem:[#allocation2 + $0x1c8] sm:$0xff]
        %v428 = vld [vmem:[#allocation2 + $0x1d0] sm:$0xff]
        %v429 = vld [vmem:[#allocation2 + $0x1d8] sm:$0xff]
        %v430 = vld [vmem:[#allocation2 + $0x1e0] sm:$0xff]
        %v431 = vld [vmem:[#allocation2 + $0x1e8] sm:$0xff]
        %v432 = vld [vmem:[#allocation2 + $0x1f0] sm:$0xff]
        %v433 = vld [vmem:[#allocation2 + $0x1f8] sm:$0xff]
        %v434 = vld [vmem:[%s281] sm:$0xff]
        %v435 = vld [vmem:[%s281 + $0x8] sm:$0xf]
        %v436 = vld [vmem:[%s281 + $0xc] sm:$0xff]
        %v437 = vld [vmem:[%s281 + $0x14] sm:$0xf]
        %v438 = vld [vmem:[%s281 + $0x18] sm:$0xff]
        %v439 = vld [vmem:[%s281 + $0x20] sm:$0xf]
        %v440 = vld [vmem:[%s281 + $0x24] sm:$0xff]
        %v441 = vld [vmem:[%s281 + $0x2c] sm:$0xf]
        %v442 = vld [vmem:[%s281 + $0x30] sm:$0xff]
        %v443 = vld [vmem:[%s281 + $0x38] sm:$0xf]
        %v444 = vld [vmem:[%s281 + $0x3c] sm:$0xff]
        %v445 = vld [vmem:[%s281 + $0x44] sm:$0xf]
        %v446 = vld [vmem:[%s281 + $0x48] sm:$0xff]
        %v447 = vld [vmem:[%s281 + $0x50] sm:$0xf]
        %v448 = vld [vmem:[%s281 + $0x54] sm:$0xff]
        %v449 = vld [vmem:[%s281 + $0x5c] sm:$0xf]
        %v450 = vld [vmem:[%s281 + $0x60] sm:$0xff]
        %v451 = vld [vmem:[%s281 + $0x68] sm:$0xf]
        %v452 = vld [vmem:[%s281 + $0x6c] sm:$0xff]
        %v453 = vld [vmem:[%s281 + $0x74] sm:$0xf]
        %v454 = vld [vmem:[%s281 + $0x78] sm:$0xff]
        %v455 = vld [vmem:[%s281 + $0x80] sm:$0xf]
        %v456 = vld [vmem:[%s281 + $0x84] sm:$0xff]
        %v457 = vld [vmem:[%s281 + $0x8c] sm:$0xf]
        %v458 = vld [vmem:[%s281 + $0x90] sm:$0xff]
        %v459 = vld [vmem:[%s281 + $0x98] sm:$0xf]
        %v460 = vld [vmem:[%s281 + $0x9c] sm:$0xff]
        %v461 = vld [vmem:[%s281 + $0xa4] sm:$0xf]
        %v462 = vld [vmem:[%s281 + $0xa8] sm:$0xff]
        %v463 = vld [vmem:[%s281 + $0xb0] sm:$0xf]
        %v464 = vld [vmem:[%s281 + $0xb4] sm:$0xff]
        %v465 = vld [vmem:[%s281 + $0xbc] sm:$0xf]
        %v466 = vld [vmem:[%s281 + $0xc0] sm:$0xff]
        %v467 = vld [vmem:[%s281 + $0xc8] sm:$0xf]
        %v468 = vld [vmem:[%s281 + $0xcc] sm:$0xff]
        %v469 = vld [vmem:[%s281 + $0xd4] sm:$0xf]
        %v470 = vld [vmem:[%s281 + $0xd8] sm:$0xff]
        %v471 = vld [vmem:[%s281 + $0xe0] sm:$0xf]
        %v472 = vld [vmem:[%s281 + $0xe4] sm:$0xff]
        %v473 = vld [vmem:[%s281 + $0xec] sm:$0xf]
        %v474 = vld [vmem:[%s281 + $0xf0] sm:$0xff]
        %v475 = vld [vmem:[%s281 + $0xf8] sm:$0xf]
        %v476 = vld [vmem:[%s281 + $0xfc] sm:$0xff]
        %v477 = vld [vmem:[%s281 + $0x104] sm:$0xf]
        %v478 = vld [vmem:[%s281 + $0x108] sm:$0xff]
        %v479 = vld [vmem:[%s281 + $0x110] sm:$0xf]
        %v480 = vld [vmem:[%s281 + $0x114] sm:$0xff]
        %v481 = vld [vmem:[%s281 + $0x11c] sm:$0xf]
        %v482 = vld [vmem:[%s281 + $0x120] sm:$0xff]
        %v483 = vld [vmem:[%s281 + $0x128] sm:$0xf]
        %v484 = vld [vmem:[%s281 + $0x12c] sm:$0xff]
        %v485 = vld [vmem:[%s281 + $0x134] sm:$0xf]
        %v486 = vld [vmem:[%s281 + $0x138] sm:$0xff]
        %v487 = vld [vmem:[%s281 + $0x140] sm:$0xf]
        %v488 = vld [vmem:[%s281 + $0x144] sm:$0xff]
        %v489 = vld [vmem:[%s281 + $0x14c] sm:$0xf]
        %v490 = vld [vmem:[%s281 + $0x150] sm:$0xff]
        %v491 = vld [vmem:[%s281 + $0x158] sm:$0xf]
        %v492 = vld [vmem:[%s281 + $0x15c] sm:$0xff]
        %v493 = vld [vmem:[%s281 + $0x164] sm:$0xf]
        %v494 = vld [vmem:[%s281 + $0x168] sm:$0xff]
        %v495 = vld [vmem:[%s281 + $0x170] sm:$0xf]
        %v496 = vld [vmem:[%s281 + $0x174] sm:$0xff]
        %v497 = vld [vmem:[%s281 + $0x17c] sm:$0xf]
        %v498 = vld [vmem:[%s281 + $0x180] sm:$0xff]
        %v499 = vld [vmem:[%s281 + $0x188] sm:$0xf]
        %v500 = vld [vmem:[%s281 + $0x18c] sm:$0xff]
        %v501 = vld [vmem:[%s281 + $0x194] sm:$0xf]
        %v502 = vld [vmem:[%s281 + $0x198] sm:$0xff]
        %v503 = vld [vmem:[%s281 + $0x1a0] sm:$0xf]
        %v504 = vld [vmem:[%s281 + $0x1a4] sm:$0xff]
        %v505 = vld [vmem:[%s281 + $0x1ac] sm:$0xf]
        %v506 = vld [vmem:[%s281 + $0x1b0] sm:$0xff]
        %v507 = vld [vmem:[%s281 + $0x1b8] sm:$0xf]
        %v508 = vld [vmem:[%s281 + $0x1bc] sm:$0xff]
        %v509 = vld [vmem:[%s281 + $0x1c4] sm:$0xf]
        %v510 = vld [vmem:[%s281 + $0x1c8] sm:$0xff]
        %v511 = vld [vmem:[%s281 + $0x1d0] sm:$0xf]
        %v512 = vld [vmem:[%s281 + $0x1d4] sm:$0xff]
        %v513 = vld [vmem:[%s281 + $0x1dc] sm:$0xf]
        %v514 = vld [vmem:[%s281 + $0x1e0] sm:$0xff]
        %v515 = vld [vmem:[%s281 + $0x1e8] sm:$0xf]
        %v516 = vld [vmem:[%s281 + $0x1ec] sm:$0xff]
        %v517 = vld [vmem:[%s281 + $0x1f4] sm:$0xf]
        %v518 = vld [vmem:[%s281 + $0x1f8] sm:$0xff]
        %v519 = vld [vmem:[%s281 + $0x200] sm:$0xf]
        %v520 = vld [vmem:[%s281 + $0x204] sm:$0xff]
        %v521 = vld [vmem:[%s281 + $0x20c] sm:$0xf]
        %v522 = vld [vmem:[%s281 + $0x210] sm:$0xff]
        %v523 = vld [vmem:[%s281 + $0x218] sm:$0xf]
        %v524 = vld [vmem:[%s281 + $0x21c] sm:$0xff]
        %v525 = vld [vmem:[%s281 + $0x224] sm:$0xf]
        %v526 = vld [vmem:[%s281 + $0x228] sm:$0xff]
        %v527 = vld [vmem:[%s281 + $0x230] sm:$0xf]
        %v528 = vld [vmem:[%s281 + $0x234] sm:$0xff]
        %v529 = vld [vmem:[%s281 + $0x23c] sm:$0xf]
        %v530 = vld [vmem:[%s281 + $0x240] sm:$0xff]
        %v531 = vld [vmem:[%s281 + $0x248] sm:$0xf]
        %v532 = vld [vmem:[%s281 + $0x24c] sm:$0xff]
        %v533 = vld [vmem:[%s281 + $0x254] sm:$0xf]
        %v534 = vld [vmem:[%s281 + $0x258] sm:$0xff]
        %v535 = vld [vmem:[%s281 + $0x260] sm:$0xf]
        %v536 = vld [vmem:[%s281 + $0x264] sm:$0xff]
        %v537 = vld [vmem:[%s281 + $0x26c] sm:$0xf]
        %v538 = vld [vmem:[%s281 + $0x270] sm:$0xff]
        %v539 = vld [vmem:[%s281 + $0x278] sm:$0xf]
        %v540 = vld [vmem:[%s281 + $0x27c] sm:$0xff]
        %v541 = vld [vmem:[%s281 + $0x284] sm:$0xf]
        %v542 = vld [vmem:[%s281 + $0x288] sm:$0xff]
        %v543 = vld [vmem:[%s281 + $0x290] sm:$0xf]
        %v544 = vld [vmem:[%s281 + $0x294] sm:$0xff]
        %v545 = vld [vmem:[%s281 + $0x29c] sm:$0xf]
        %v546 = vld [vmem:[%s281 + $0x2a0] sm:$0xff]
        %v547 = vld [vmem:[%s281 + $0x2a8] sm:$0xf]
        %v548 = vld [vmem:[%s281 + $0x2ac] sm:$0xff]
        %v549 = vld [vmem:[%s281 + $0x2b4] sm:$0xf]
        %v550 = vld [vmem:[%s281 + $0x2b8] sm:$0xff]
        %v551 = vld [vmem:[%s281 + $0x2c0] sm:$0xf]
        %v552 = vld [vmem:[%s281 + $0x2c4] sm:$0xff]
        %v553 = vld [vmem:[%s281 + $0x2cc] sm:$0xf]
        %v554 = vld [vmem:[%s281 + $0x2d0] sm:$0xff]
        %v555 = vld [vmem:[%s281 + $0x2d8] sm:$0xf]
        %v556 = vld [vmem:[%s281 + $0x2dc] sm:$0xff]
        %v557 = vld [vmem:[%s281 + $0x2e4] sm:$0xf]
        %v558 = vld [vmem:[%s281 + $0x2e8] sm:$0xff]
        %v559 = vld [vmem:[%s281 + $0x2f0] sm:$0xf]
        %v560 = vld [vmem:[%s281 + $0x2f4] sm:$0xff]
        %v561 = vld [vmem:[%s281 + $0x2fc] sm:$0xf]
        %v562 = vld [vmem:[%s291] sm:$0xf]
        %v563 = vld [vmem:[%s291 + $0x4] sm:$0xf]
        %v564 = vld [vmem:[%s291 + $0x8] sm:$0xf]
        %v565 = vld [vmem:[%s291 + $0xc] sm:$0xf]
        %v566 = vld [vmem:[%s291 + $0x10] sm:$0xf]
        %v567 = vld [vmem:[%s291 + $0x14] sm:$0xf]
        %v568 = vld [vmem:[%s291 + $0x18] sm:$0xf]
        %v569 = vld [vmem:[%s291 + $0x1c] sm:$0xf]
        %v570 = vld [vmem:[%s291 + $0x20] sm:$0xf]
        %v571 = vld [vmem:[%s291 + $0x24] sm:$0xf]
        %v572 = vld [vmem:[%s291 + $0x28] sm:$0xf]
        %v573 = vld [vmem:[%s291 + $0x2c] sm:$0xf]
        %v574 = vld [vmem:[%s291 + $0x30] sm:$0xf]
        %v575 = vld [vmem:[%s291 + $0x34] sm:$0xf]
        %v576 = vld [vmem:[%s291 + $0x38] sm:$0xf]
        %v577 = vld [vmem:[%s291 + $0x3c] sm:$0xf]
        %v578 = vld [vmem:[%s291 + $0x40] sm:$0xf]
        %v579 = vld [vmem:[%s291 + $0x44] sm:$0xf]
        %v580 = vld [vmem:[%s291 + $0x48] sm:$0xf]
        %v581 = vld [vmem:[%s291 + $0x4c] sm:$0xf]
        %v582 = vld [vmem:[%s291 + $0x50] sm:$0xf]
        %v583 = vld [vmem:[%s291 + $0x54] sm:$0xf]
        %v584 = vld [vmem:[%s291 + $0x58] sm:$0xf]
        %v585 = vld [vmem:[%s291 + $0x5c] sm:$0xf]
        %v586 = vld [vmem:[%s291 + $0x60] sm:$0xf]
        %v587 = vld [vmem:[%s291 + $0x64] sm:$0xf]
        %v588 = vld [vmem:[%s291 + $0x68] sm:$0xf]
        %v589 = vld [vmem:[%s291 + $0x6c] sm:$0xf]
        %v590 = vld [vmem:[%s291 + $0x70] sm:$0xf]
        %v591 = vld [vmem:[%s291 + $0x74] sm:$0xf]
        %v592 = vld [vmem:[%s291 + $0x78] sm:$0xf]
        %v593 = vld [vmem:[%s291 + $0x7c] sm:$0xf]
        %v594 = vld [vmem:[%s291 + $0x80] sm:$0xf]
        %v595 = vld [vmem:[%s291 + $0x84] sm:$0xf]
        %v596 = vld [vmem:[%s291 + $0x88] sm:$0xf]
        %v597 = vld [vmem:[%s291 + $0x8c] sm:$0xf]
        %v598 = vld [vmem:[%s291 + $0x90] sm:$0xf]
        %v599 = vld [vmem:[%s291 + $0x94] sm:$0xf]
        %v600 = vld [vmem:[%s291 + $0x98] sm:$0xf]
        %v601 = vld [vmem:[%s291 + $0x9c] sm:$0xf]
        %v602 = vld [vmem:[%s291 + $0xa0] sm:$0xf]
        %v603 = vld [vmem:[%s291 + $0xa4] sm:$0xf]
        %v604 = vld [vmem:[%s291 + $0xa8] sm:$0xf]
        %v733 = vunpack.c.l.b16 %v434
        %v734 = vunpack.c.h.b16 %v434
        %v735 = vunpack.c.l.b16 %v435
        %v736 = vunpack.c.l.b16 %v436
        %v737 = vunpack.c.h.b16 %v436
        %v738 = vunpack.c.l.b16 %v437
        %v739 = vunpack.c.l.b16 %v438
        %v740 = vunpack.c.h.b16 %v438
        %v741 = vunpack.c.l.b16 %v439
        %v742 = vunpack.c.l.b16 %v440
        %v743 = vunpack.c.h.b16 %v440
        %v744 = vunpack.c.l.b16 %v441
        %v745 = vunpack.c.l.b16 %v442
        %v746 = vunpack.c.h.b16 %v442
        %v747 = vunpack.c.l.b16 %v443
        %v748 = vunpack.c.l.b16 %v444
        %v749 = vunpack.c.h.b16 %v444
        %v750 = vunpack.c.l.b16 %v445
        %v751 = vunpack.c.l.b16 %v446
        %v752 = vunpack.c.h.b16 %v446
        %v753 = vunpack.c.l.b16 %v447
        %v754 = vunpack.c.l.b16 %v448
        %v755 = vunpack.c.h.b16 %v448
        %v756 = vunpack.c.l.b16 %v449
        %v757 = vunpack.c.l.b16 %v450
        %v758 = vunpack.c.h.b16 %v450
        %v759 = vunpack.c.l.b16 %v451
        %v760 = vunpack.c.l.b16 %v452
        %v761 = vunpack.c.h.b16 %v452
        %v762 = vunpack.c.l.b16 %v453
        %v763 = vunpack.c.l.b16 %v454
        %v764 = vunpack.c.h.b16 %v454
        %v765 = vunpack.c.l.b16 %v455
        %v766 = vunpack.c.l.b16 %v456
        %v767 = vunpack.c.h.b16 %v456
        %v768 = vunpack.c.l.b16 %v457
        %v769 = vunpack.c.l.b16 %v458
        %v770 = vunpack.c.h.b16 %v458
        %v771 = vunpack.c.l.b16 %v459
        %v772 = vunpack.c.l.b16 %v460
        %v773 = vunpack.c.h.b16 %v460
        %v774 = vunpack.c.l.b16 %v461
        %v775 = vunpack.c.l.b16 %v462
        %v776 = vunpack.c.h.b16 %v462
        %v777 = vunpack.c.l.b16 %v463
        %v778 = vunpack.c.l.b16 %v464
        %v779 = vunpack.c.h.b16 %v464
        %v780 = vunpack.c.l.b16 %v465
        %v781 = vunpack.c.l.b16 %v466
        %v782 = vunpack.c.h.b16 %v466
        %v783 = vunpack.c.l.b16 %v467
        %v784 = vunpack.c.l.b16 %v468
        %v785 = vunpack.c.h.b16 %v468
        %v786 = vunpack.c.l.b16 %v469
        %v787 = vunpack.c.l.b16 %v470
        %v788 = vunpack.c.h.b16 %v470
        %v789 = vunpack.c.l.b16 %v471
        %v790 = vunpack.c.l.b16 %v472
        %v791 = vunpack.c.h.b16 %v472
        %v792 = vunpack.c.l.b16 %v473
        %v793 = vunpack.c.l.b16 %v474
        %v794 = vunpack.c.h.b16 %v474
        %v795 = vunpack.c.l.b16 %v475
        %v796 = vunpack.c.l.b16 %v476
        %v797 = vunpack.c.h.b16 %v476
        %v798 = vunpack.c.l.b16 %v477
        %v799 = vunpack.c.l.b16 %v478
        %v800 = vunpack.c.h.b16 %v478
        %v801 = vunpack.c.l.b16 %v479
        %v802 = vunpack.c.l.b16 %v480
        %v803 = vunpack.c.h.b16 %v480
        %v804 = vunpack.c.l.b16 %v481
        %v805 = vunpack.c.l.b16 %v482
        %v806 = vunpack.c.h.b16 %v482
        %v807 = vunpack.c.l.b16 %v483
        %v808 = vunpack.c.l.b16 %v484
        %v809 = vunpack.c.h.b16 %v484
        %v810 = vunpack.c.l.b16 %v485
        %v811 = vunpack.c.l.b16 %v486
        %v812 = vunpack.c.h.b16 %v486
        %v813 = vunpack.c.l.b16 %v487
        %v814 = vunpack.c.l.b16 %v488
        %v815 = vunpack.c.h.b16 %v488
        %v816 = vunpack.c.l.b16 %v489
        %v817 = vunpack.c.l.b16 %v490
        %v818 = vunpack.c.h.b16 %v490
        %v819 = vunpack.c.l.b16 %v491
        %v820 = vunpack.c.l.b16 %v492
        %v821 = vunpack.c.h.b16 %v492
        %v822 = vunpack.c.l.b16 %v493
        %v823 = vunpack.c.l.b16 %v494
        %v824 = vunpack.c.h.b16 %v494
        %v825 = vunpack.c.l.b16 %v495
        %v826 = vunpack.c.l.b16 %v496
        %v827 = vunpack.c.h.b16 %v496
        %v828 = vunpack.c.l.b16 %v497
        %v829 = vunpack.c.l.b16 %v498
        %v830 = vunpack.c.h.b16 %v498
        %v831 = vunpack.c.l.b16 %v499
        %v832 = vunpack.c.l.b16 %v500
        %v833 = vunpack.c.h.b16 %v500
        %v834 = vunpack.c.l.b16 %v501
        %v835 = vunpack.c.l.b16 %v502
        %v836 = vunpack.c.h.b16 %v502
        %v837 = vunpack.c.l.b16 %v503
        %v838 = vunpack.c.l.b16 %v504
        %v839 = vunpack.c.h.b16 %v504
        %v840 = vunpack.c.l.b16 %v505
        %v841 = vunpack.c.l.b16 %v506
        %v842 = vunpack.c.h.b16 %v506
        %v843 = vunpack.c.l.b16 %v507
        %v844 = vunpack.c.l.b16 %v508
        %v845 = vunpack.c.h.b16 %v508
        %v846 = vunpack.c.l.b16 %v509
        %v847 = vunpack.c.l.b16 %v510
        %v848 = vunpack.c.h.b16 %v510
        %v849 = vunpack.c.l.b16 %v511
        %v850 = vunpack.c.l.b16 %v512
        %v851 = vunpack.c.h.b16 %v512
        %v852 = vunpack.c.l.b16 %v513
        %v853 = vunpack.c.l.b16 %v514
        %v854 = vunpack.c.h.b16 %v514
        %v855 = vunpack.c.l.b16 %v515
        %v856 = vunpack.c.l.b16 %v516
        %v857 = vunpack.c.h.b16 %v516
        %v858 = vunpack.c.l.b16 %v517
        %v859 = vunpack.c.l.b16 %v518
        %v860 = vunpack.c.h.b16 %v518
        %v861 = vunpack.c.l.b16 %v519
        %v862 = vunpack.c.l.b16 %v520
        %v863 = vunpack.c.h.b16 %v520
        %v864 = vunpack.c.l.b16 %v521
        %v865 = vunpack.c.l.b16 %v522
        %v866 = vunpack.c.h.b16 %v522
        %v867 = vunpack.c.l.b16 %v523
        %v868 = vunpack.c.l.b16 %v524
        %v869 = vunpack.c.h.b16 %v524
        %v870 = vunpack.c.l.b16 %v525
        %v871 = vunpack.c.l.b16 %v526
        %v872 = vunpack.c.h.b16 %v526
        %v873 = vunpack.c.l.b16 %v527
        %v874 = vunpack.c.l.b16 %v528
        %v875 = vunpack.c.h.b16 %v528
        %v876 = vunpack.c.l.b16 %v529
        %v877 = vunpack.c.l.b16 %v530
        %v878 = vunpack.c.h.b16 %v530
        %v879 = vunpack.c.l.b16 %v531
        %v880 = vunpack.c.l.b16 %v532
        %v881 = vunpack.c.h.b16 %v532
        %v882 = vunpack.c.l.b16 %v533
        %v883 = vunpack.c.l.b16 %v534
        %v884 = vunpack.c.h.b16 %v534
        %v885 = vunpack.c.l.b16 %v535
        %v886 = vunpack.c.l.b16 %v536
        %v887 = vunpack.c.h.b16 %v536
        %v888 = vunpack.c.l.b16 %v537
        %v889 = vunpack.c.l.b16 %v538
        %v890 = vunpack.c.h.b16 %v538
        %v891 = vunpack.c.l.b16 %v539
        %v892 = vunpack.c.l.b16 %v540
        %v893 = vunpack.c.h.b16 %v540
        %v894 = vunpack.c.l.b16 %v541
        %v895 = vunpack.c.l.b16 %v542
        %v896 = vunpack.c.h.b16 %v542
        %v897 = vunpack.c.l.b16 %v543
        %v898 = vunpack.c.l.b16 %v544
        %v899 = vunpack.c.h.b16 %v544
        %v900 = vunpack.c.l.b16 %v545
        %v901 = vunpack.c.l.b16 %v546
        %v902 = vunpack.c.h.b16 %v546
        %v903 = vunpack.c.l.b16 %v547
        %v904 = vunpack.c.l.b16 %v548
        %v905 = vunpack.c.h.b16 %v548
        %v906 = vunpack.c.l.b16 %v549
        %v907 = vunpack.c.l.b16 %v550
        %v908 = vunpack.c.h.b16 %v550
        %v909 = vunpack.c.l.b16 %v551
        %v910 = vunpack.c.l.b16 %v552
        %v911 = vunpack.c.h.b16 %v552
        %v912 = vunpack.c.l.b16 %v553
        %v913 = vunpack.c.l.b16 %v554
        %v914 = vunpack.c.h.b16 %v554
        %v915 = vunpack.c.l.b16 %v555
        %v916 = vunpack.c.l.b16 %v556
        %v917 = vunpack.c.h.b16 %v556
        %v918 = vunpack.c.l.b16 %v557
        %v919 = vunpack.c.l.b16 %v558
        %v920 = vunpack.c.h.b16 %v558
        %v921 = vunpack.c.l.b16 %v559
        %v922 = vunpack.c.l.b16 %v560
        %v923 = vunpack.c.h.b16 %v560
        %v924 = vunpack.c.l.b16 %v561
        %v925 = vpack.c.b16 %v736, %v733
        %v926 = vpack.c.b16 %v737, %v734
        %v927 = vpack.c.b16 %v738, %v735
        %v928 = vpack.c.b16 %v742, %v739
        %v929 = vpack.c.b16 %v743, %v740
        %v930 = vpack.c.b16 %v744, %v741
        %v931 = vpack.c.b16 %v748, %v745
        %v932 = vpack.c.b16 %v749, %v746
        %v933 = vpack.c.b16 %v750, %v747
        %v934 = vpack.c.b16 %v754, %v751
        %v935 = vpack.c.b16 %v755, %v752
        %v936 = vpack.c.b16 %v756, %v753
        %v937 = vpack.c.b16 %v760, %v757
        %v938 = vpack.c.b16 %v761, %v758
        %v939 = vpack.c.b16 %v762, %v759
        %v940 = vpack.c.b16 %v766, %v763
        %v941 = vpack.c.b16 %v767, %v764
        %v942 = vpack.c.b16 %v768, %v765
        %v943 = vpack.c.b16 %v772, %v769
        %v944 = vpack.c.b16 %v773, %v770
        %v945 = vpack.c.b16 %v774, %v771
        %v946 = vpack.c.b16 %v778, %v775
        %v947 = vpack.c.b16 %v779, %v776
        %v948 = vpack.c.b16 %v780, %v777
        %v949 = vpack.c.b16 %v784, %v781
        %v950 = vpack.c.b16 %v785, %v782
        %v951 = vpack.c.b16 %v786, %v783
        %v952 = vpack.c.b16 %v790, %v787
        %v953 = vpack.c.b16 %v791, %v788
        %v954 = vpack.c.b16 %v792, %v789
        %v955 = vpack.c.b16 %v796, %v793
        %v956 = vpack.c.b16 %v797, %v794
        %v957 = vpack.c.b16 %v798, %v795
        %v958 = vpack.c.b16 %v802, %v799
        %v959 = vpack.c.b16 %v803, %v800
        %v960 = vpack.c.b16 %v804, %v801
        %v961 = vpack.c.b16 %v808, %v805
        %v962 = vpack.c.b16 %v809, %v806
        %v963 = vpack.c.b16 %v810, %v807
        %v964 = vpack.c.b16 %v814, %v811
        %v965 = vpack.c.b16 %v815, %v812
        %v966 = vpack.c.b16 %v816, %v813
        %v967 = vpack.c.b16 %v820, %v817
        %v968 = vpack.c.b16 %v821, %v818
        %v969 = vpack.c.b16 %v822, %v819
        %v970 = vpack.c.b16 %v826, %v823
        %v971 = vpack.c.b16 %v827, %v824
        %v972 = vpack.c.b16 %v828, %v825
        %v973 = vpack.c.b16 %v832, %v829
        %v974 = vpack.c.b16 %v833, %v830
        %v975 = vpack.c.b16 %v834, %v831
        %v976 = vpack.c.b16 %v838, %v835
        %v977 = vpack.c.b16 %v839, %v836
        %v978 = vpack.c.b16 %v840, %v837
        %v979 = vpack.c.b16 %v844, %v841
        %v980 = vpack.c.b16 %v845, %v842
        %v981 = vpack.c.b16 %v846, %v843
        %v982 = vpack.c.b16 %v850, %v847
        %v983 = vpack.c.b16 %v851, %v848
        %v984 = vpack.c.b16 %v852, %v849
        %v985 = vpack.c.b16 %v856, %v853
        %v986 = vpack.c.b16 %v857, %v854
        %v987 = vpack.c.b16 %v858, %v855
        %v988 = vpack.c.b16 %v862, %v859
        %v989 = vpack.c.b16 %v863, %v860
        %v990 = vpack.c.b16 %v864, %v861
        %v991 = vpack.c.b16 %v868, %v865
        %v992 = vpack.c.b16 %v869, %v866
        %v993 = vpack.c.b16 %v870, %v867
        %v994 = vpack.c.b16 %v874, %v871
        %v995 = vpack.c.b16 %v875, %v872
        %v996 = vpack.c.b16 %v876, %v873
        %v997 = vpack.c.b16 %v880, %v877
        %v998 = vpack.c.b16 %v881, %v878
        %v999 = vpack.c.b16 %v882, %v879
        %v1000 = vpack.c.b16 %v886, %v883
        %v1001 = vpack.c.b16 %v887, %v884
        %v1002 = vpack.c.b16 %v888, %v885
        %v1003 = vpack.c.b16 %v892, %v889
        %v1004 = vpack.c.b16 %v893, %v890
        %v1005 = vpack.c.b16 %v894, %v891
        %v1006 = vpack.c.b16 %v898, %v895
        %v1007 = vpack.c.b16 %v899, %v896
        %v1008 = vpack.c.b16 %v900, %v897
        %v1009 = vpack.c.b16 %v904, %v901
        %v1010 = vpack.c.b16 %v905, %v902
        %v1011 = vpack.c.b16 %v906, %v903
        %v1012 = vpack.c.b16 %v910, %v907
        %v1013 = vpack.c.b16 %v911, %v908
        %v1014 = vpack.c.b16 %v912, %v909
        %v1015 = vpack.c.b16 %v916, %v913
        %v1016 = vpack.c.b16 %v917, %v914
        %v1017 = vpack.c.b16 %v918, %v915
        %v1018 = vpack.c.b16 %v922, %v919
        %v1019 = vpack.c.b16 %v923, %v920
        %v1020 = vpack.c.b16 %v924, %v921
        %v1128 = vunpack.c.l.b16 %v562
        %v1129 = vunpack.c.l.b16 %v563
        %v1130 = vunpack.c.l.b16 %v564
        %v1131 = vunpack.c.l.b16 %v565
        %v1132 = vunpack.c.l.b16 %v566
        %v1133 = vunpack.c.l.b16 %v567
        %v1134 = vunpack.c.l.b16 %v568
        %v1135 = vunpack.c.l.b16 %v569
        %v1136 = vunpack.c.l.b16 %v570
        %v1137 = vunpack.c.l.b16 %v571
        %v1138 = vunpack.c.l.b16 %v572
        %v1139 = vunpack.c.l.b16 %v573
        %v1140 = vunpack.c.l.b16 %v574
        %v1141 = vunpack.c.l.b16 %v575
        %v1142 = vunpack.c.l.b16 %v576
        %v1143 = vunpack.c.l.b16 %v577
        %v1144 = vunpack.c.l.b16 %v578
        %v1145 = vunpack.c.l.b16 %v579
        %v1146 = vunpack.c.l.b16 %v580
        %v1147 = vunpack.c.l.b16 %v581
        %v1148 = vunpack.c.l.b16 %v582
        %v1149 = vunpack.c.l.b16 %v583
        %v1150 = vunpack.c.l.b16 %v584
        %v1151 = vunpack.c.l.b16 %v585
        %v1152 = vunpack.c.l.b16 %v586
        %v1153 = vunpack.c.l.b16 %v587
        %v1154 = vunpack.c.l.b16 %v588
        %v1155 = vunpack.c.l.b16 %v589
        %v1156 = vunpack.c.l.b16 %v590
        %v1157 = vunpack.c.l.b16 %v591
        %v1158 = vunpack.c.l.b16 %v592
        %v1159 = vunpack.c.l.b16 %v593
        %v1160 = vunpack.c.l.b16 %v594
        %v1161 = vunpack.c.l.b16 %v595
        %v1162 = vunpack.c.l.b16 %v596
        %v1163 = vunpack.c.l.b16 %v597
        %v1164 = vunpack.c.l.b16 %v598
        %v1165 = vunpack.c.l.b16 %v599
        %v1166 = vunpack.c.l.b16 %v600
        %v1167 = vunpack.c.l.b16 %v601
        %v1168 = vunpack.c.l.b16 %v602
        %v1169 = vunpack.c.l.b16 %v603
        %v1170 = vunpack.c.l.b16 %v604
        %v1171 = vpack.c.b16 %v1129, %v1128
        %v1172 = vpack.c.b16 %v1131, %v1130
        %v1173 = vpack.c.b16 %v1133, %v1132
        %v1174 = vpack.c.b16 %v1135, %v1134
        %v1175 = vpack.c.b16 %v1137, %v1136
        %v1176 = vpack.c.b16 %v1139, %v1138
        %v1177 = vpack.c.b16 %v1141, %v1140
        %v1178 = vpack.c.b16 %v1143, %v1142
        %v1179 = vpack.c.b16 %v1145, %v1144
        %v1180 = vpack.c.b16 %v1147, %v1146
        %v1181 = vpack.c.b16 %v1149, %v1148
        %v1182 = vpack.c.b16 %v1151, %v1150
        %v1183 = vpack.c.b16 %v1153, %v1152
        %v1184 = vpack.c.b16 %v1155, %v1154
        %v1185 = vpack.c.b16 %v1157, %v1156
        %v1186 = vpack.c.b16 %v1159, %v1158
        %v1187 = vpack.c.b16 %v1161, %v1160
        %v1188 = vpack.c.b16 %v1163, %v1162
        %v1189 = vpack.c.b16 %v1165, %v1164
        %v1190 = vpack.c.b16 %v1167, %v1166
        %v1191 = vpack.c.b16 %v1169, %v1168
        %v1192 = vpack.c.b16 %v1170, %v1170
        %vm1214 = vcmask 719872
        %v1216 = vsel %vm1214, %v927, 0
        %v1219 = vsel %vm1214, %v930, 0
        %v1222 = vsel %vm1214, %v933, 0
        %v1225 = vsel %vm1214, %v936, 0
        %v1228 = vsel %vm1214, %v939, 0
        %v1231 = vsel %vm1214, %v942, 0
        %v1234 = vsel %vm1214, %v945, 0
        %v1237 = vsel %vm1214, %v948, 0
        %v1240 = vsel %vm1214, %v951, 0
        %v1243 = vsel %vm1214, %v954, 0
        %v1246 = vsel %vm1214, %v957, 0
        %v1249 = vsel %vm1214, %v960, 0
        %v1252 = vsel %vm1214, %v963, 0
        %v1255 = vsel %vm1214, %v966, 0
        %v1258 = vsel %vm1214, %v969, 0
        %v1261 = vsel %vm1214, %v972, 0
        %v1264 = vsel %vm1214, %v975, 0
        %v1267 = vsel %vm1214, %v978, 0
        %v1270 = vsel %vm1214, %v981, 0
        %v1273 = vsel %vm1214, %v984, 0
        %v1276 = vsel %vm1214, %v987, 0
        %v1279 = vsel %vm1214, %v990, 0
        %v1282 = vsel %vm1214, %v993, 0
        %v1285 = vsel %vm1214, %v996, 0
        %v1288 = vsel %vm1214, %v999, 0
        %v1291 = vsel %vm1214, %v1002, 0
        %v1294 = vsel %vm1214, %v1005, 0
        %v1297 = vsel %vm1214, %v1008, 0
        %v1300 = vsel %vm1214, %v1011, 0
        %v1303 = vsel %vm1214, %v1014, 0
        %v1306 = vsel %vm1214, %v1017, 0
        %v1309 = vsel %vm1214, %v1020, 0
        %vm1311 = vcmask 1043456
        %v1313 = vsel %vm1311, %v1192, 0
        %1315 = vmatprep.subr.bf16.mxu0 0
        %1316 = vmatpush1.bf16.msra.mxu0 %v1171
        %1317 = vmatprep.subr.bf16.mxu0 0
        %1318 = vmatpush1.bf16.msra.mxu0 %v1172
        %1319 = vmatprep.subr.bf16.mxu0 0
        %1320 = vmatpush1.bf16.msra.mxu0 %v1173
        %1321 = vmatprep.subr.bf16.mxu0 0
        %1322 = vmatpush1.bf16.msra.mxu0 %v1174
        %1323 = vmatprep.subr.bf16.mxu0 0
        %1324 = vmatpush1.bf16.msra.mxu0 %v1175
        %1325 = vmatprep.subr.bf16.mxu0 0
        %1326 = vmatpush1.bf16.msra.mxu0 %v1176
        %1327 = vmatprep.subr.bf16.mxu0 0
        %1328 = vmatpush1.bf16.msra.mxu0 %v1177
        %1329 = vmatprep.subr.bf16.mxu0 0
        %1330 = vmatpush1.bf16.msra.mxu0 %v1178
        %1331 = vmatprep.subr.bf16.mxu0 0
        %1332 = vmatpush1.bf16.msra.mxu0 %v1179
        %1333 = vmatprep.subr.bf16.mxu0 0
        %1334 = vmatpush1.bf16.msra.mxu0 %v1180
        %1335 = vmatprep.subr.bf16.mxu0 0
        %1336 = vmatpush1.bf16.msra.mxu0 %v1181
        %1337 = vmatprep.subr.bf16.mxu0 0
        %1338 = vmatpush1.bf16.msra.mxu0 %v1182
        %1339 = vmatprep.subr.bf16.mxu0 0
        %1340 = vmatpush1.bf16.msra.mxu0 %v1183
        %1341 = vmatprep.subr.bf16.mxu0 0
        %1342 = vmatpush1.bf16.msra.mxu0 %v1184
        %1343 = vmatprep.subr.bf16.mxu0 0
        %1344 = vmatpush1.bf16.msra.mxu0 %v1185
        %1345 = vmatprep.subr.bf16.mxu0 0
        %1346 = vmatpush1.bf16.msra.mxu0 %v1186
        %1347 = vmatprep.mubr.bf16.mxu0 %v926
        %1348 = vmatmul.mubr.bf16.gmra.mrb[0].mxu0 %v925
        %v1349 = vpop.f32.mrb[0].mxu0
        %v1350 = vadd.f32 0.0, %v1349
        %v1351 = vpop.f32.mrb[0].mxu0
        %v1352 = vpop.f32.mrb[0].mxu0
        %v1353 = vadd.f32 0.0, %v1352
        %v1354 = vpop.f32.mrb[0].mxu0
        %1355 = vmatprep.mubr.bf16.mxu0 %v929
        %1356 = vmatmul.mubr.bf16.gmra.mrb[0].mxu0 %v928
        %v1357 = vpop.f32.mrb[0].mxu0
        %v1358 = vadd.f32 0.0, %v1357
        %v1359 = vpop.f32.mrb[0].mxu0
        %v1360 = vpop.f32.mrb[0].mxu0
        %v1361 = vadd.f32 0.0, %v1360
        %v1362 = vpop.f32.mrb[0].mxu0
        %1363 = vmatprep.mubr.bf16.mxu0 %v932
        %1364 = vmatmul.mubr.bf16.gmra.mrb[0].mxu0 %v931
        %v1365 = vpop.f32.mrb[0].mxu0
        %v1366 = vadd.f32 0.0, %v1365
        %v1367 = vpop.f32.mrb[0].mxu0
        %v1368 = vpop.f32.mrb[0].mxu0
        %v1369 = vadd.f32 0.0, %v1368
        %v1370 = vpop.f32.mrb[0].mxu0
        %1371 = vmatprep.mubr.bf16.mxu0 %v935
        %1372 = vmatmul.mubr.bf16.gmra.mrb[0].mxu0 %v934
        %v1373 = vpop.f32.mrb[0].mxu0
        %v1374 = vadd.f32 0.0, %v1373
        %v1375 = vpop.f32.mrb[0].mxu0
        %v1376 = vpop.f32.mrb[0].mxu0
        %v1377 = vadd.f32 0.0, %v1376
        %v1378 = vpop.f32.mrb[0].mxu0
        %1379 = vmatprep.mubr.bf16.mxu0 %v938
        %1380 = vmatmul.mubr.bf16.gmra.mrb[0].mxu0 %v937
        %v1381 = vpop.f32.mrb[0].mxu0
        %v1382 = vadd.f32 0.0, %v1381
        %v1383 = vpop.f32.mrb[0].mxu0
        %v1384 = vpop.f32.mrb[0].mxu0
        %v1385 = vadd.f32 0.0, %v1384
        %v1386 = vpop.f32.mrb[0].mxu0
        %1387 = vmatprep.mubr.bf16.mxu0 %v941
        %1388 = vmatmul.mubr.bf16.gmra.mrb[0].mxu0 %v940
        %v1389 = vpop.f32.mrb[0].mxu0
        %v1390 = vadd.f32 0.0, %v1389
        %v1391 = vpop.f32.mrb[0].mxu0
        %v1392 = vpop.f32.mrb[0].mxu0
        %v1393 = vadd.f32 0.0, %v1392
        %v1394 = vpop.f32.mrb[0].mxu0
        %1395 = vmatprep.mubr.bf16.mxu0 %v944
        %1396 = vmatmul.mubr.bf16.gmra.mrb[0].mxu0 %v943
        %v1397 = vpop.f32.mrb[0].mxu0
        %v1398 = vadd.f32 0.0, %v1397
        %v1399 = vpop.f32.mrb[0].mxu0
        %v1400 = vpop.f32.mrb[0].mxu0
        %v1401 = vadd.f32 0.0, %v1400
        %v1402 = vpop.f32.mrb[0].mxu0
        %1403 = vmatprep.mubr.bf16.mxu0 %v947
        %1404 = vmatmul.mubr.bf16.gmra.mrb[0].mxu0 %v946
        %v1405 = vpop.f32.mrb[0].mxu0
        %v1406 = vadd.f32 0.0, %v1405
        %v1407 = vpop.f32.mrb[0].mxu0
        %v1408 = vpop.f32.mrb[0].mxu0
        %v1409 = vadd.f32 0.0, %v1408
        %v1410 = vpop.f32.mrb[0].mxu0
        %1411 = vmatprep.mubr.bf16.mxu0 %v950
        %1412 = vmatmul.mubr.bf16.gmra.mrb[0].mxu0 %v949
        %v1413 = vpop.f32.mrb[0].mxu0
        %v1414 = vadd.f32 0.0, %v1413
        %v1415 = vpop.f32.mrb[0].mxu0
        %v1416 = vpop.f32.mrb[0].mxu0
        %v1417 = vadd.f32 0.0, %v1416
        %v1418 = vpop.f32.mrb[0].mxu0
        %1419 = vmatprep.mubr.bf16.mxu0 %v953
        %1420 = vmatmul.mubr.bf16.gmra.mrb[0].mxu0 %v952
        %v1421 = vpop.f32.mrb[0].mxu0
        %v1422 = vadd.f32 0.0, %v1421
        %v1423 = vpop.f32.mrb[0].mxu0
        %v1424 = vpop.f32.mrb[0].mxu0
        %v1425 = vadd.f32 0.0, %v1424
        %v1426 = vpop.f32.mrb[0].mxu0
        %1427 = vmatprep.mubr.bf16.mxu0 %v956
        %1428 = vmatmul.mubr.bf16.gmra.mrb[0].mxu0 %v955
        %v1429 = vpop.f32.mrb[0].mxu0
        %v1430 = vadd.f32 0.0, %v1429
        %v1431 = vpop.f32.mrb[0].mxu0
        %v1432 = vpop.f32.mrb[0].mxu0
        %v1433 = vadd.f32 0.0, %v1432
        %v1434 = vpop.f32.mrb[0].mxu0
        %1435 = vmatprep.mubr.bf16.mxu0 %v959
        %1436 = vmatmul.mubr.bf16.gmra.mrb[0].mxu0 %v958
        %v1437 = vpop.f32.mrb[0].mxu0
        %v1438 = vadd.f32 0.0, %v1437
        %v1439 = vpop.f32.mrb[0].mxu0
        %v1440 = vpop.f32.mrb[0].mxu0
        %v1441 = vadd.f32 0.0, %v1440
        %v1442 = vpop.f32.mrb[0].mxu0
        %1443 = vmatprep.mubr.bf16.mxu0 %v962
        %1444 = vmatmul.mubr.bf16.gmra.mrb[0].mxu0 %v961
        %v1445 = vpop.f32.mrb[0].mxu0
        %v1446 = vadd.f32 0.0, %v1445
        %v1447 = vpop.f32.mrb[0].mxu0
        %v1448 = vpop.f32.mrb[0].mxu0
        %v1449 = vadd.f32 0.0, %v1448
        %v1450 = vpop.f32.mrb[0].mxu0
        %1451 = vmatprep.mubr.bf16.mxu0 %v965
        %1452 = vmatmul.mubr.bf16.gmra.mrb[0].mxu0 %v964
        %v1453 = vpop.f32.mrb[0].mxu0
        %v1454 = vadd.f32 0.0, %v1453
        %v1455 = vpop.f32.mrb[0].mxu0
        %v1456 = vpop.f32.mrb[0].mxu0
        %v1457 = vadd.f32 0.0, %v1456
        %v1458 = vpop.f32.mrb[0].mxu0
        %1459 = vmatprep.mubr.bf16.mxu0 %v968
        %1460 = vmatmul.mubr.bf16.gmra.mrb[0].mxu0 %v967
        %v1461 = vpop.f32.mrb[0].mxu0
        %v1462 = vadd.f32 0.0, %v1461
        %v1463 = vpop.f32.mrb[0].mxu0
        %v1464 = vpop.f32.mrb[0].mxu0
        %v1465 = vadd.f32 0.0, %v1464
        %v1466 = vpop.f32.mrb[0].mxu0
        %1467 = vmatprep.mubr.bf16.mxu0 %v971
        %1468 = vmatmul.mubr.bf16.gmra.mrb[0].mxu0 %v970
        %v1469 = vpop.f32.mrb[0].mxu0
        %v1470 = vadd.f32 0.0, %v1469
        %v1471 = vpop.f32.mrb[0].mxu0
        %v1472 = vpop.f32.mrb[0].mxu0
        %v1473 = vadd.f32 0.0, %v1472
        %v1474 = vpop.f32.mrb[0].mxu0
        %1475 = vmatprep.mubr.bf16.mxu0 %v974
        %1476 = vmatmul.mubr.bf16.gmra.mrb[0].mxu0 %v973
        %v1477 = vpop.f32.mrb[0].mxu0
        %v1478 = vadd.f32 0.0, %v1477
        %v1479 = vpop.f32.mrb[0].mxu0
        %v1480 = vpop.f32.mrb[0].mxu0
        %v1481 = vadd.f32 0.0, %v1480
        %v1482 = vpop.f32.mrb[0].mxu0
        %1483 = vmatprep.mubr.bf16.mxu0 %v977
        %1484 = vmatmul.mubr.bf16.gmra.mrb[0].mxu0 %v976
        %v1485 = vpop.f32.mrb[0].mxu0
        %v1486 = vadd.f32 0.0, %v1485
        %v1487 = vpop.f32.mrb[0].mxu0
        %v1488 = vpop.f32.mrb[0].mxu0
        %v1489 = vadd.f32 0.0, %v1488
        %v1490 = vpop.f32.mrb[0].mxu0
        %1491 = vmatprep.mubr.bf16.mxu0 %v980
        %1492 = vmatmul.mubr.bf16.gmra.mrb[0].mxu0 %v979
        %v1493 = vpop.f32.mrb[0].mxu0
        %v1494 = vadd.f32 0.0, %v1493
        %v1495 = vpop.f32.mrb[0].mxu0
        %v1496 = vpop.f32.mrb[0].mxu0
        %v1497 = vadd.f32 0.0, %v1496
        %v1498 = vpop.f32.mrb[0].mxu0
        %1499 = vmatprep.mubr.bf16.mxu0 %v983
        %1500 = vmatmul.mubr.bf16.gmra.mrb[0].mxu0 %v982
        %v1501 = vpop.f32.mrb[0].mxu0
        %v1502 = vadd.f32 0.0, %v1501
        %v1503 = vpop.f32.mrb[0].mxu0
        %v1504 = vpop.f32.mrb[0].mxu0
        %v1505 = vadd.f32 0.0, %v1504
        %v1506 = vpop.f32.mrb[0].mxu0
        %1507 = vmatprep.mubr.bf16.mxu0 %v986
        %1508 = vmatmul.mubr.bf16.gmra.mrb[0].mxu0 %v985
        %v1509 = vpop.f32.mrb[0].mxu0
        %v1510 = vadd.f32 0.0, %v1509
        %v1511 = vpop.f32.mrb[0].mxu0
        %v1512 = vpop.f32.mrb[0].mxu0
        %v1513 = vadd.f32 0.0, %v1512
        %v1514 = vpop.f32.mrb[0].mxu0
        %1515 = vmatprep.mubr.bf16.mxu0 %v989
        %1516 = vmatmul.mubr.bf16.gmra.mrb[0].mxu0 %v988
        %v1517 = vpop.f32.mrb[0].mxu0
        %v1518 = vadd.f32 0.0, %v1517
        %v1519 = vpop.f32.mrb[0].mxu0
        %v1520 = vpop.f32.mrb[0].mxu0
        %v1521 = vadd.f32 0.0, %v1520
        %v1522 = vpop.f32.mrb[0].mxu0
        %1523 = vmatprep.mubr.bf16.mxu0 %v992
        %1524 = vmatmul.mubr.bf16.gmra.mrb[0].mxu0 %v991
        %v1525 = vpop.f32.mrb[0].mxu0
        %v1526 = vadd.f32 0.0, %v1525
        %v1527 = vpop.f32.mrb[0].mxu0
        %v1528 = vpop.f32.mrb[0].mxu0
        %v1529 = vadd.f32 0.0, %v1528
        %v1530 = vpop.f32.mrb[0].mxu0
        %1531 = vmatprep.mubr.bf16.mxu0 %v995
        %1532 = vmatmul.mubr.bf16.gmra.mrb[0].mxu0 %v994
        %v1533 = vpop.f32.mrb[0].mxu0
        %v1534 = vadd.f32 0.0, %v1533
        %v1535 = vpop.f32.mrb[0].mxu0
        %v1536 = vpop.f32.mrb[0].mxu0
        %v1537 = vadd.f32 0.0, %v1536
        %v1538 = vpop.f32.mrb[0].mxu0
        %1539 = vmatprep.mubr.bf16.mxu0 %v998
        %1540 = vmatmul.mubr.bf16.gmra.mrb[0].mxu0 %v997
        %v1541 = vpop.f32.mrb[0].mxu0
        %v1542 = vadd.f32 0.0, %v1541
        %v1543 = vpop.f32.mrb[0].mxu0
        %v1544 = vpop.f32.mrb[0].mxu0
        %v1545 = vadd.f32 0.0, %v1544
        %v1546 = vpop.f32.mrb[0].mxu0
        %1547 = vmatprep.mubr.bf16.mxu0 %v1001
        %1548 = vmatmul.mubr.bf16.gmra.mrb[0].mxu0 %v1000
        %v1549 = vpop.f32.mrb[0].mxu0
        %v1550 = vadd.f32 0.0, %v1549
        %v1551 = vpop.f32.mrb[0].mxu0
        %v1552 = vpop.f32.mrb[0].mxu0
        %v1553 = vadd.f32 0.0, %v1552
        %v1554 = vpop.f32.mrb[0].mxu0
        %1555 = vmatprep.mubr.bf16.mxu0 %v1004
        %1556 = vmatmul.mubr.bf16.gmra.mrb[0].mxu0 %v1003
        %v1557 = vpop.f32.mrb[0].mxu0
        %v1558 = vadd.f32 0.0, %v1557
        %v1559 = vpop.f32.mrb[0].mxu0
        %v1560 = vpop.f32.mrb[0].mxu0
        %v1561 = vadd.f32 0.0, %v1560
        %v1562 = vpop.f32.mrb[0].mxu0
        %1563 = vmatprep.mubr.bf16.mxu0 %v1007
        %1564 = vmatmul.mubr.bf16.gmra.mrb[0].mxu0 %v1006
        %v1565 = vpop.f32.mrb[0].mxu0
        %v1566 = vadd.f32 0.0, %v1565
        %v1567 = vpop.f32.mrb[0].mxu0
        %v1568 = vpop.f32.mrb[0].mxu0
        %v1569 = vadd.f32 0.0, %v1568
        %v1570 = vpop.f32.mrb[0].mxu0
        %1571 = vmatprep.mubr.bf16.mxu0 %v1010
        %1572 = vmatmul.mubr.bf16.gmra.mrb[0].mxu0 %v1009
        %v1573 = vpop.f32.mrb[0].mxu0
        %v1574 = vadd.f32 0.0, %v1573
        %v1575 = vpop.f32.mrb[0].mxu0
        %v1576 = vpop.f32.mrb[0].mxu0
        %v1577 = vadd.f32 0.0, %v1576
        %v1578 = vpop.f32.mrb[0].mxu0
        %1579 = vmatprep.mubr.bf16.mxu0 %v1013
        %1580 = vmatmul.mubr.bf16.gmra.mrb[0].mxu0 %v1012
        %v1581 = vpop.f32.mrb[0].mxu0
        %v1582 = vadd.f32 0.0, %v1581
        %v1583 = vpop.f32.mrb[0].mxu0
        %v1584 = vpop.f32.mrb[0].mxu0
        %v1585 = vadd.f32 0.0, %v1584
        %v1586 = vpop.f32.mrb[0].mxu0
        %1587 = vmatprep.mubr.bf16.mxu0 %v1016
        %1588 = vmatmul.mubr.bf16.gmra.mrb[0].mxu0 %v1015
        %v1589 = vpop.f32.mrb[0].mxu0
        %v1590 = vadd.f32 0.0, %v1589
        %v1591 = vpop.f32.mrb[0].mxu0
        %v1592 = vpop.f32.mrb[0].mxu0
        %v1593 = vadd.f32 0.0, %v1592
        %v1594 = vpop.f32.mrb[0].mxu0
        %1595 = vmatprep.mubr.bf16.mxu0 %v1019
        %1596 = vmatmul.mubr.bf16.gmra.mrb[0].mxu0 %v1018
        %v1597 = vpop.f32.mrb[0].mxu0
        %v1598 = vadd.f32 0.0, %v1597
        %v1599 = vpop.f32.mrb[0].mxu0
        %v1600 = vpop.f32.mrb[0].mxu0
        %v1601 = vadd.f32 0.0, %v1600
        %v1602 = vpop.f32.mrb[0].mxu0
        %1603 = vdwg.mxu0
        %1604 = vmatprep.subr.bf16.mxu0 0
        %1605 = vmatpush1.bf16.msra.mxu0 %v1187
        %1606 = vmatprep.subr.bf16.mxu0 0
        %1607 = vmatpush1.bf16.msra.mxu0 %v1188
        %1608 = vmatprep.subr.bf16.mxu0 0
        %1609 = vmatpush1.bf16.msra.mxu0 %v1189
        %1610 = vmatprep.subr.bf16.mxu0 0
        %1611 = vmatpush1.bf16.msra.mxu0 %v1190
        %1612 = vmatprep.subr.bf16.mxu0 0
        %1613 = vmatpush1.bf16.msra.mxu0 %v1191
        %1614 = vmatprep.subr.bf16.mxu0 0
        %1615 = vmatpush1.bf16.msra.mxu0 %v1313
        %1616 = vmatprep.subr.bf16.mxu0 0
        %1617 = vmatpush1.bf16.msra.mxu0 0
        %1618 = vmatprep.subr.bf16.mxu0 0
        %1619 = vmatpush1.bf16.msra.mxu0 0
        %1620 = vmatprep.subr.bf16.mxu0 0
        %1621 = vmatpush1.bf16.msra.mxu0 0
        %1622 = vmatprep.subr.bf16.mxu0 0
        %1623 = vmatpush1.bf16.msra.mxu0 0
        %1624 = vmatprep.subr.bf16.mxu0 0
        %1625 = vmatpush1.bf16.msra.mxu0 0
        %1626 = vmatprep.subr.bf16.mxu0 0
        %1627 = vmatpush1.bf16.msra.mxu0 0
        %1628 = vmatprep.subr.bf16.mxu0 0
        %1629 = vmatpush1.bf16.msra.mxu0 0
        %1630 = vmatprep.subr.bf16.mxu0 0
        %1631 = vmatpush1.bf16.msra.mxu0 0
        %1632 = vmatprep.subr.bf16.mxu0 0
        %1633 = vmatpush1.bf16.msra.mxu0 0
        %1634 = vmatprep.subr.bf16.mxu0 0
        %1635 = vmatpush1.bf16.msra.mxu0 0
        %1636 = vmatprep.mubr.bf16.mxu0 0
        %1637 = vmatmul.mubr.bf16.gmra.mrb[0].mxu0 %v1216
        %v1638 = vpop.f32.mrb[0].mxu0
        %v1639 = vadd.f32 %v1350, %v1638
        %v1640 = vpop.f32.mrb[0].mxu0
        %v1641 = vpop.f32.mrb[0].mxu0
        %v1642 = vadd.f32 %v1353, %v1641
        %v1643 = vpop.f32.mrb[0].mxu0
        %1644 = vmatprep.mubr.bf16.mxu0 0
        %1645 = vmatmul.mubr.bf16.gmra.mrb[0].mxu0 %v1219
        %v1646 = vpop.f32.mrb[0].mxu0
        %v1647 = vadd.f32 %v1358, %v1646
        %v1648 = vpop.f32.mrb[0].mxu0
        %v1649 = vpop.f32.mrb[0].mxu0
        %v1650 = vadd.f32 %v1361, %v1649
        %v1651 = vpop.f32.mrb[0].mxu0
        %1652 = vmatprep.mubr.bf16.mxu0 0
        %1653 = vmatmul.mubr.bf16.gmra.mrb[0].mxu0 %v1222
        %v1654 = vpop.f32.mrb[0].mxu0
        %v1655 = vadd.f32 %v1366, %v1654
        %v1656 = vpop.f32.mrb[0].mxu0
        %v1657 = vpop.f32.mrb[0].mxu0
        %v1658 = vadd.f32 %v1369, %v1657
        %v1659 = vpop.f32.mrb[0].mxu0
        %1660 = vmatprep.mubr.bf16.mxu0 0
        %1661 = vmatmul.mubr.bf16.gmra.mrb[0].mxu0 %v1225
        %v1662 = vpop.f32.mrb[0].mxu0
        %v1663 = vadd.f32 %v1374, %v1662
        %v1664 = vpop.f32.mrb[0].mxu0
        %v1665 = vpop.f32.mrb[0].mxu0
        %v1666 = vadd.f32 %v1377, %v1665
        %v1667 = vpop.f32.mrb[0].mxu0
        %1668 = vmatprep.mubr.bf16.mxu0 0
        %1669 = vmatmul.mubr.bf16.gmra.mrb[0].mxu0 %v1228
        %v1670 = vpop.f32.mrb[0].mxu0
        %v1671 = vadd.f32 %v1382, %v1670
        %v1672 = vpop.f32.mrb[0].mxu0
        %v1673 = vpop.f32.mrb[0].mxu0
        %v1674 = vadd.f32 %v1385, %v1673
        %v1675 = vpop.f32.mrb[0].mxu0
        %1676 = vmatprep.mubr.bf16.mxu0 0
        %1677 = vmatmul.mubr.bf16.gmra.mrb[0].mxu0 %v1231
        %v1678 = vpop.f32.mrb[0].mxu0
        %v1679 = vadd.f32 %v1390, %v1678
        %v1680 = vpop.f32.mrb[0].mxu0
        %v1681 = vpop.f32.mrb[0].mxu0
        %v1682 = vadd.f32 %v1393, %v1681
        %v1683 = vpop.f32.mrb[0].mxu0
        %1684 = vmatprep.mubr.bf16.mxu0 0
        %1685 = vmatmul.mubr.bf16.gmra.mrb[0].mxu0 %v1234
        %v1686 = vpop.f32.mrb[0].mxu0
        %v1687 = vadd.f32 %v1398, %v1686
        %v1688 = vpop.f32.mrb[0].mxu0
        %v1689 = vpop.f32.mrb[0].mxu0
        %v1690 = vadd.f32 %v1401, %v1689
        %v1691 = vpop.f32.mrb[0].mxu0
        %1692 = vmatprep.mubr.bf16.mxu0 0
        %1693 = vmatmul.mubr.bf16.gmra.mrb[0].mxu0 %v1237
        %v1694 = vpop.f32.mrb[0].mxu0
        %v1695 = vadd.f32 %v1406, %v1694
        %v1696 = vpop.f32.mrb[0].mxu0
        %v1697 = vpop.f32.mrb[0].mxu0
        %v1698 = vadd.f32 %v1409, %v1697
        %v1699 = vpop.f32.mrb[0].mxu0
        %1700 = vmatprep.mubr.bf16.mxu0 0
        %1701 = vmatmul.mubr.bf16.gmra.mrb[0].mxu0 %v1240
        %v1702 = vpop.f32.mrb[0].mxu0
        %v1703 = vadd.f32 %v1414, %v1702
        %v1704 = vpop.f32.mrb[0].mxu0
        %v1705 = vpop.f32.mrb[0].mxu0
        %v1706 = vadd.f32 %v1417, %v1705
        %v1707 = vpop.f32.mrb[0].mxu0
        %1708 = vmatprep.mubr.bf16.mxu0 0
        %1709 = vmatmul.mubr.bf16.gmra.mrb[0].mxu0 %v1243
        %v1710 = vpop.f32.mrb[0].mxu0
        %v1711 = vadd.f32 %v1422, %v1710
        %v1712 = vpop.f32.mrb[0].mxu0
        %v1713 = vpop.f32.mrb[0].mxu0
        %v1714 = vadd.f32 %v1425, %v1713
        %v1715 = vpop.f32.mrb[0].mxu0
        %1716 = vmatprep.mubr.bf16.mxu0 0
        %1717 = vmatmul.mubr.bf16.gmra.mrb[0].mxu0 %v1246
        %v1718 = vpop.f32.mrb[0].mxu0
        %v1719 = vadd.f32 %v1430, %v1718
        %v1720 = vpop.f32.mrb[0].mxu0
        %v1721 = vpop.f32.mrb[0].mxu0
        %v1722 = vadd.f32 %v1433, %v1721
        %v1723 = vpop.f32.mrb[0].mxu0
        %1724 = vmatprep.mubr.bf16.mxu0 0
        %1725 = vmatmul.mubr.bf16.gmra.mrb[0].mxu0 %v1249
        %v1726 = vpop.f32.mrb[0].mxu0
        %v1727 = vadd.f32 %v1438, %v1726
        %v1728 = vpop.f32.mrb[0].mxu0
        %v1729 = vpop.f32.mrb[0].mxu0
        %v1730 = vadd.f32 %v1441, %v1729
        %v1731 = vpop.f32.mrb[0].mxu0
        %1732 = vmatprep.mubr.bf16.mxu0 0
        %1733 = vmatmul.mubr.bf16.gmra.mrb[0].mxu0 %v1252
        %v1734 = vpop.f32.mrb[0].mxu0
        %v1735 = vadd.f32 %v1446, %v1734
        %v1736 = vpop.f32.mrb[0].mxu0
        %v1737 = vpop.f32.mrb[0].mxu0
        %v1738 = vadd.f32 %v1449, %v1737
        %v1739 = vpop.f32.mrb[0].mxu0
        %1740 = vmatprep.mubr.bf16.mxu0 0
        %1741 = vmatmul.mubr.bf16.gmra.mrb[0].mxu0 %v1255
        %v1742 = vpop.f32.mrb[0].mxu0
        %v1743 = vadd.f32 %v1454, %v1742
        %v1744 = vpop.f32.mrb[0].mxu0
        %v1745 = vpop.f32.mrb[0].mxu0
        %v1746 = vadd.f32 %v1457, %v1745
        %v1747 = vpop.f32.mrb[0].mxu0
        %1748 = vmatprep.mubr.bf16.mxu0 0
        %1749 = vmatmul.mubr.bf16.gmra.mrb[0].mxu0 %v1258
        %v1750 = vpop.f32.mrb[0].mxu0
        %v1751 = vadd.f32 %v1462, %v1750
        %v1752 = vpop.f32.mrb[0].mxu0
        %v1753 = vpop.f32.mrb[0].mxu0
        %v1754 = vadd.f32 %v1465, %v1753
        %v1755 = vpop.f32.mrb[0].mxu0
        %1756 = vmatprep.mubr.bf16.mxu0 0
        %1757 = vmatmul.mubr.bf16.gmra.mrb[0].mxu0 %v1261
        %v1758 = vpop.f32.mrb[0].mxu0
        %v1759 = vadd.f32 %v1470, %v1758
        %v1760 = vpop.f32.mrb[0].mxu0
        %v1761 = vpop.f32.mrb[0].mxu0
        %v1762 = vadd.f32 %v1473, %v1761
        %v1763 = vpop.f32.mrb[0].mxu0
        %1764 = vmatprep.mubr.bf16.mxu0 0
        %1765 = vmatmul.mubr.bf16.gmra.mrb[0].mxu0 %v1264
        %v1766 = vpop.f32.mrb[0].mxu0
        %v1767 = vadd.f32 %v1478, %v1766
        %v1768 = vpop.f32.mrb[0].mxu0
        %v1769 = vpop.f32.mrb[0].mxu0
        %v1770 = vadd.f32 %v1481, %v1769
        %v1771 = vpop.f32.mrb[0].mxu0
        %1772 = vmatprep.mubr.bf16.mxu0 0
        %1773 = vmatmul.mubr.bf16.gmra.mrb[0].mxu0 %v1267
        %v1774 = vpop.f32.mrb[0].mxu0
        %v1775 = vadd.f32 %v1486, %v1774
        %v1776 = vpop.f32.mrb[0].mxu0
        %v1777 = vpop.f32.mrb[0].mxu0
        %v1778 = vadd.f32 %v1489, %v1777
        %v1779 = vpop.f32.mrb[0].mxu0
        %1780 = vmatprep.mubr.bf16.mxu0 0
        %1781 = vmatmul.mubr.bf16.gmra.mrb[0].mxu0 %v1270
        %v1782 = vpop.f32.mrb[0].mxu0
        %v1783 = vadd.f32 %v1494, %v1782
        %v1784 = vpop.f32.mrb[0].mxu0
        %v1785 = vpop.f32.mrb[0].mxu0
        %v1786 = vadd.f32 %v1497, %v1785
        %v1787 = vpop.f32.mrb[0].mxu0
        %1788 = vmatprep.mubr.bf16.mxu0 0
        %1789 = vmatmul.mubr.bf16.gmra.mrb[0].mxu0 %v1273
        %v1790 = vpop.f32.mrb[0].mxu0
        %v1791 = vadd.f32 %v1502, %v1790
        %v1792 = vpop.f32.mrb[0].mxu0
        %v1793 = vpop.f32.mrb[0].mxu0
        %v1794 = vadd.f32 %v1505, %v1793
        %v1795 = vpop.f32.mrb[0].mxu0
        %1796 = vmatprep.mubr.bf16.mxu0 0
        %1797 = vmatmul.mubr.bf16.gmra.mrb[0].mxu0 %v1276
        %v1798 = vpop.f32.mrb[0].mxu0
        %v1799 = vadd.f32 %v1510, %v1798
        %v1800 = vpop.f32.mrb[0].mxu0
        %v1801 = vpop.f32.mrb[0].mxu0
        %v1802 = vadd.f32 %v1513, %v1801
        %v1803 = vpop.f32.mrb[0].mxu0
        %1804 = vmatprep.mubr.bf16.mxu0 0
        %1805 = vmatmul.mubr.bf16.gmra.mrb[0].mxu0 %v1279
        %v1806 = vpop.f32.mrb[0].mxu0
        %v1807 = vadd.f32 %v1518, %v1806
        %v1808 = vpop.f32.mrb[0].mxu0
        %v1809 = vpop.f32.mrb[0].mxu0
        %v1810 = vadd.f32 %v1521, %v1809
        %v1811 = vpop.f32.mrb[0].mxu0
        %1812 = vmatprep.mubr.bf16.mxu0 0
        %1813 = vmatmul.mubr.bf16.gmra.mrb[0].mxu0 %v1282
        %v1814 = vpop.f32.mrb[0].mxu0
        %v1815 = vadd.f32 %v1526, %v1814
        %v1816 = vpop.f32.mrb[0].mxu0
        %v1817 = vpop.f32.mrb[0].mxu0
        %v1818 = vadd.f32 %v1529, %v1817
        %v1819 = vpop.f32.mrb[0].mxu0
        %1820 = vmatprep.mubr.bf16.mxu0 0
        %1821 = vmatmul.mubr.bf16.gmra.mrb[0].mxu0 %v1285
        %v1822 = vpop.f32.mrb[0].mxu0
        %v1823 = vadd.f32 %v1534, %v1822
        %v1824 = vpop.f32.mrb[0].mxu0
        %v1825 = vpop.f32.mrb[0].mxu0
        %v1826 = vadd.f32 %v1537, %v1825
        %v1827 = vpop.f32.mrb[0].mxu0
        %1828 = vmatprep.mubr.bf16.mxu0 0
        %1829 = vmatmul.mubr.bf16.gmra.mrb[0].mxu0 %v1288
        %v1830 = vpop.f32.mrb[0].mxu0
        %v1831 = vadd.f32 %v1542, %v1830
        %v1832 = vpop.f32.mrb[0].mxu0
        %v1833 = vpop.f32.mrb[0].mxu0
        %v1834 = vadd.f32 %v1545, %v1833
        %v1835 = vpop.f32.mrb[0].mxu0
        %1836 = vmatprep.mubr.bf16.mxu0 0
        %1837 = vmatmul.mubr.bf16.gmra.mrb[0].mxu0 %v1291
        %v1838 = vpop.f32.mrb[0].mxu0
        %v1839 = vadd.f32 %v1550, %v1838
        %v1840 = vpop.f32.mrb[0].mxu0
        %v1841 = vpop.f32.mrb[0].mxu0
        %v1842 = vadd.f32 %v1553, %v1841
        %v1843 = vpop.f32.mrb[0].mxu0
        %1844 = vmatprep.mubr.bf16.mxu0 0
        %1845 = vmatmul.mubr.bf16.gmra.mrb[0].mxu0 %v1294
        %v1846 = vpop.f32.mrb[0].mxu0
        %v1847 = vadd.f32 %v1558, %v1846
        %v1848 = vpop.f32.mrb[0].mxu0
        %v1849 = vpop.f32.mrb[0].mxu0
        %v1850 = vadd.f32 %v1561, %v1849
        %v1851 = vpop.f32.mrb[0].mxu0
        %1852 = vmatprep.mubr.bf16.mxu0 0
        %1853 = vmatmul.mubr.bf16.gmra.mrb[0].mxu0 %v1297
        %v1854 = vpop.f32.mrb[0].mxu0
        %v1855 = vadd.f32 %v1566, %v1854
        %v1856 = vpop.f32.mrb[0].mxu0
        %v1857 = vpop.f32.mrb[0].mxu0
        %v1858 = vadd.f32 %v1569, %v1857
        %v1859 = vpop.f32.mrb[0].mxu0
        %1860 = vmatprep.mubr.bf16.mxu0 0
        %1861 = vmatmul.mubr.bf16.gmra.mrb[0].mxu0 %v1300
        %v1862 = vpop.f32.mrb[0].mxu0
        %v1863 = vadd.f32 %v1574, %v1862
        %v1864 = vpop.f32.mrb[0].mxu0
        %v1865 = vpop.f32.mrb[0].mxu0
        %v1866 = vadd.f32 %v1577, %v1865
        %v1867 = vpop.f32.mrb[0].mxu0
        %1868 = vmatprep.mubr.bf16.mxu0 0
        %1869 = vmatmul.mubr.bf16.gmra.mrb[0].mxu0 %v1303
        %v1870 = vpop.f32.mrb[0].mxu0
        %v1871 = vadd.f32 %v1582, %v1870
        %v1872 = vpop.f32.mrb[0].mxu0
        %v1873 = vpop.f32.mrb[0].mxu0
        %v1874 = vadd.f32 %v1585, %v1873
        %v1875 = vpop.f32.mrb[0].mxu0
        %1876 = vmatprep.mubr.bf16.mxu0 0
        %1877 = vmatmul.mubr.bf16.gmra.mrb[0].mxu0 %v1306
        %v1878 = vpop.f32.mrb[0].mxu0
        %v1879 = vadd.f32 %v1590, %v1878
        %v1880 = vpop.f32.mrb[0].mxu0
        %v1881 = vpop.f32.mrb[0].mxu0
        %v1882 = vadd.f32 %v1593, %v1881
        %v1883 = vpop.f32.mrb[0].mxu0
        %1884 = vmatprep.mubr.bf16.mxu0 0
        %1885 = vmatmul.mubr.bf16.gmra.mrb[0].mxu0 %v1309
        %v1886 = vpop.f32.mrb[0].mxu0
        %v1887 = vadd.f32 %v1598, %v1886
        %v1888 = vpop.f32.mrb[0].mxu0
        %v1889 = vpop.f32.mrb[0].mxu0
        %v1890 = vadd.f32 %v1601, %v1889
        %v1891 = vpop.f32.mrb[0].mxu0
        %1892 = vdwg.mxu0
        %v1893 = vadd.f32 %v370, %v1639
        %v1894 = vadd.f32 %v371, %v1642
        %v1895 = vadd.f32 %v372, %v1647
        %v1896 = vadd.f32 %v373, %v1650
        %v1897 = vadd.f32 %v374, %v1655
        %v1898 = vadd.f32 %v375, %v1658
        %v1899 = vadd.f32 %v376, %v1663
        %v1900 = vadd.f32 %v377, %v1666
        %v1901 = vadd.f32 %v378, %v1671
        %v1902 = vadd.f32 %v379, %v1674
        %v1903 = vadd.f32 %v380, %v1679
        %v1904 = vadd.f32 %v381, %v1682
        %v1905 = vadd.f32 %v382, %v1687
        %v1906 = vadd.f32 %v383, %v1690
        %v1907 = vadd.f32 %v384, %v1695
        %v1908 = vadd.f32 %v385, %v1698
        %v1909 = vadd.f32 %v386, %v1703
        %v1910 = vadd.f32 %v387, %v1706
        %v1911 = vadd.f32 %v388, %v1711
        %v1912 = vadd.f32 %v389, %v1714
        %v1913 = vadd.f32 %v390, %v1719
        %v1914 = vadd.f32 %v391, %v1722
        %v1915 = vadd.f32 %v392, %v1727
        %v1916 = vadd.f32 %v393, %v1730
        %v1917 = vadd.f32 %v394, %v1735
        %v1918 = vadd.f32 %v395, %v1738
        %v1919 = vadd.f32 %v396, %v1743
        %v1920 = vadd.f32 %v397, %v1746
        %v1921 = vadd.f32 %v398, %v1751
        %v1922 = vadd.f32 %v399, %v1754
        %v1923 = vadd.f32 %v400, %v1759
        %v1924 = vadd.f32 %v401, %v1762
        %v1925 = vadd.f32 %v402, %v1767
        %v1926 = vadd.f32 %v403, %v1770
        %v1927 = vadd.f32 %v404, %v1775
        %v1928 = vadd.f32 %v405, %v1778
        %v1929 = vadd.f32 %v406, %v1783
        %v1930 = vadd.f32 %v407, %v1786
        %v1931 = vadd.f32 %v408, %v1791
        %v1932 = vadd.f32 %v409, %v1794
        %v1933 = vadd.f32 %v410, %v1799
        %v1934 = vadd.f32 %v411, %v1802
        %v1935 = vadd.f32 %v412, %v1807
        %v1936 = vadd.f32 %v413, %v1810
        %v1937 = vadd.f32 %v414, %v1815
        %v1938 = vadd.f32 %v415, %v1818
        %v1939 = vadd.f32 %v416, %v1823
        %v1940 = vadd.f32 %v417, %v1826
        %v1941 = vadd.f32 %v418, %v1831
        %v1942 = vadd.f32 %v419, %v1834
        %v1943 = vadd.f32 %v420, %v1839
        %v1944 = vadd.f32 %v421, %v1842
        %v1945 = vadd.f32 %v422, %v1847
        %v1946 = vadd.f32 %v423, %v1850
        %v1947 = vadd.f32 %v424, %v1855
        %v1948 = vadd.f32 %v425, %v1858
        %v1949 = vadd.f32 %v426, %v1863
        %v1950 = vadd.f32 %v427, %v1866
        %v1951 = vadd.f32 %v428, %v1871
        %v1952 = vadd.f32 %v429, %v1874
        %v1953 = vadd.f32 %v430, %v1879
        %v1954 = vadd.f32 %v431, %v1882
        %v1955 = vadd.f32 %v432, %v1887
        %v1956 = vadd.f32 %v433, %v1890
        %vm1957 = vcmask 523264
        %1958 = vst.msk [vmem:[#allocation2] sm:$0xff] %vm1957, %v1893
        %1959 = vst.msk [vmem:[#allocation2 + $0x8] sm:$0xff] %vm1957, %v1894
        %1960 = vst.msk [vmem:[#allocation2 + $0x10] sm:$0xff] %vm1957, %v1895
        %1961 = vst.msk [vmem:[#allocation2 + $0x18] sm:$0xff] %vm1957, %v1896
        %1962 = vst.msk [vmem:[#allocation2 + $0x20] sm:$0xff] %vm1957, %v1897
        %1963 = vst.msk [vmem:[#allocation2 + $0x28] sm:$0xff] %vm1957, %v1898
        %1964 = vst.msk [vmem:[#allocation2 + $0x30] sm:$0xff] %vm1957, %v1899
        %1965 = vst.msk [vmem:[#allocation2 + $0x38] sm:$0xff] %vm1957, %v1900
        %1966 = vst.msk [vmem:[#allocation2 + $0x40] sm:$0xff] %vm1957, %v1901
        %1967 = vst.msk [vmem:[#allocation2 + $0x48] sm:$0xff] %vm1957, %v1902
        %1968 = vst.msk [vmem:[#allocation2 + $0x50] sm:$0xff] %vm1957, %v1903
        %1969 = vst.msk [vmem:[#allocation2 + $0x58] sm:$0xff] %vm1957, %v1904
        %1970 = vst.msk [vmem:[#allocation2 + $0x60] sm:$0xff] %vm1957, %v1905
        %1971 = vst.msk [vmem:[#allocation2 + $0x68] sm:$0xff] %vm1957, %v1906
        %1972 = vst.msk [vmem:[#allocation2 + $0x70] sm:$0xff] %vm1957, %v1907
        %1973 = vst.msk [vmem:[#allocation2 + $0x78] sm:$0xff] %vm1957, %v1908
        %1974 = vst.msk [vmem:[#allocation2 + $0x80] sm:$0xff] %vm1957, %v1909
        %1975 = vst.msk [vmem:[#allocation2 + $0x88] sm:$0xff] %vm1957, %v1910
        %1976 = vst.msk [vmem:[#allocation2 + $0x90] sm:$0xff] %vm1957, %v1911
        %1977 = vst.msk [vmem:[#allocation2 + $0x98] sm:$0xff] %vm1957, %v1912
        %1978 = vst.msk [vmem:[#allocation2 + $0xa0] sm:$0xff] %vm1957, %v1913
        %1979 = vst.msk [vmem:[#allocation2 + $0xa8] sm:$0xff] %vm1957, %v1914
        %1980 = vst.msk [vmem:[#allocation2 + $0xb0] sm:$0xff] %vm1957, %v1915
        %1981 = vst.msk [vmem:[#allocation2 + $0xb8] sm:$0xff] %vm1957, %v1916
        %1982 = vst.msk [vmem:[#allocation2 + $0xc0] sm:$0xff] %vm1957, %v1917
        %1983 = vst.msk [vmem:[#allocation2 + $0xc8] sm:$0xff] %vm1957, %v1918
        %1984 = vst.msk [vmem:[#allocation2 + $0xd0] sm:$0xff] %vm1957, %v1919
        %1985 = vst.msk [vmem:[#allocation2 + $0xd8] sm:$0xff] %vm1957, %v1920
        %1986 = vst.msk [vmem:[#allocation2 + $0xe0] sm:$0xff] %vm1957, %v1921
        %1987 = vst.msk [vmem:[#allocation2 + $0xe8] sm:$0xff] %vm1957, %v1922
        %1988 = vst.msk [vmem:[#allocation2 + $0xf0] sm:$0xff] %vm1957, %v1923
        %1989 = vst.msk [vmem:[#allocation2 + $0xf8] sm:$0xff] %vm1957, %v1924
        %1990 = vst.msk [vmem:[#allocation2 + $0x100] sm:$0xff] %vm1957, %v1925
        %1991 = vst.msk [vmem:[#allocation2 + $0x108] sm:$0xff] %vm1957, %v1926
        %1992 = vst.msk [vmem:[#allocation2 + $0x110] sm:$0xff] %vm1957, %v1927
        %1993 = vst.msk [vmem:[#allocation2 + $0x118] sm:$0xff] %vm1957, %v1928
        %1994 = vst.msk [vmem:[#allocation2 + $0x120] sm:$0xff] %vm1957, %v1929
        %1995 = vst.msk [vmem:[#allocation2 + $0x128] sm:$0xff] %vm1957, %v1930
        %1996 = vst.msk [vmem:[#allocation2 + $0x130] sm:$0xff] %vm1957, %v1931
        %1997 = vst.msk [vmem:[#allocation2 + $0x138] sm:$0xff] %vm1957, %v1932
        %1998 = vst.msk [vmem:[#allocation2 + $0x140] sm:$0xff] %vm1957, %v1933
        %1999 = vst.msk [vmem:[#allocation2 + $0x148] sm:$0xff] %vm1957, %v1934
        %2000 = vst.msk [vmem:[#allocation2 + $0x150] sm:$0xff] %vm1957, %v1935
        %2001 = vst.msk [vmem:[#allocation2 + $0x158] sm:$0xff] %vm1957, %v1936
        %2002 = vst.msk [vmem:[#allocation2 + $0x160] sm:$0xff] %vm1957, %v1937
        %2003 = vst.msk [vmem:[#allocation2 + $0x168] sm:$0xff] %vm1957, %v1938
        %2004 = vst.msk [vmem:[#allocation2 + $0x170] sm:$0xff] %vm1957, %v1939
        %2005 = vst.msk [vmem:[#allocation2 + $0x178] sm:$0xff] %vm1957, %v1940
        %2006 = vst.msk [vmem:[#allocation2 + $0x180] sm:$0xff] %vm1957, %v1941
        %2007 = vst.msk [vmem:[#allocation2 + $0x188] sm:$0xff] %vm1957, %v1942
        %2008 = vst.msk [vmem:[#allocation2 + $0x190] sm:$0xff] %vm1957, %v1943
        %2009 = vst.msk [vmem:[#allocation2 + $0x198] sm:$0xff] %vm1957, %v1944
        %2010 = vst.msk [vmem:[#allocation2 + $0x1a0] sm:$0xff] %vm1957, %v1945
        %2011 = vst.msk [vmem:[#allocation2 + $0x1a8] sm:$0xff] %vm1957, %v1946
        %2012 = vst.msk [vmem:[#allocation2 + $0x1b0] sm:$0xff] %vm1957, %v1947
        %2013 = vst.msk [vmem:[#allocation2 + $0x1b8] sm:$0xff] %vm1957, %v1948
        %2014 = vst.msk [vmem:[#allocation2 + $0x1c0] sm:$0xff] %vm1957, %v1949
        %2015 = vst.msk [vmem:[#allocation2 + $0x1c8] sm:$0xff] %vm1957, %v1950
        %2016 = vst.msk [vmem:[#allocation2 + $0x1d0] sm:$0xff] %vm1957, %v1951
        %2017 = vst.msk [vmem:[#allocation2 + $0x1d8] sm:$0xff] %vm1957, %v1952
        %2018 = vst.msk [vmem:[#allocation2 + $0x1e0] sm:$0xff] %vm1957, %v1953
        %2019 = vst.msk [vmem:[#allocation2 + $0x1e8] sm:$0xff] %vm1957, %v1954
        %2020 = vst.msk [vmem:[#allocation2 + $0x1f0] sm:$0xff] %vm1957, %v1955
        %2021 = vst.msk [vmem:[#allocation2 + $0x1f8] sm:$0xff] %vm1957, %v1956
        // Predicated region
        $region41: #{conv3d_im2col_bn_act.1} parent=35 // pred_check
          %p2022 = pneg %p301
        $region42: #{conv3d_im2col_bn_act.1} parent=35 // pred_check_branch
          %2024 = sbr.rel (%p2022) target = $region44
        $region43: #{conv3d_im2col_bn_act.1} parent=35 // pred_region
          %v2025 = vld [vmem:[#allocation2] sm:$0xff]
          %v2026 = vld [vmem:[#allocation2 + $0x8] sm:$0xff]
          %v2027 = vld [vmem:[#allocation2 + $0x10] sm:$0xff]
          %v2028 = vld [vmem:[#allocation2 + $0x18] sm:$0xff]
          %v2029 = vld [vmem:[#allocation2 + $0x20] sm:$0xff]
          %v2030 = vld [vmem:[#allocation2 + $0x28] sm:$0xff]
          %v2031 = vld [vmem:[#allocation2 + $0x30] sm:$0xff]
          %v2032 = vld [vmem:[#allocation2 + $0x38] sm:$0xff]
          %v2033 = vld [vmem:[#allocation2 + $0x40] sm:$0xff]
          %v2034 = vld [vmem:[#allocation2 + $0x48] sm:$0xff]
          %v2035 = vld [vmem:[#allocation2 + $0x50] sm:$0xff]
          %v2036 = vld [vmem:[#allocation2 + $0x58] sm:$0xff]
          %v2037 = vld [vmem:[#allocation2 + $0x60] sm:$0xff]
          %v2038 = vld [vmem:[#allocation2 + $0x68] sm:$0xff]
          %v2039 = vld [vmem:[#allocation2 + $0x70] sm:$0xff]
          %v2040 = vld [vmem:[#allocation2 + $0x78] sm:$0xff]
          %v2041 = vld [vmem:[#allocation2 + $0x80] sm:$0xff]
          %v2042 = vld [vmem:[#allocation2 + $0x88] sm:$0xff]
          %v2043 = vld [vmem:[#allocation2 + $0x90] sm:$0xff]
          %v2044 = vld [vmem:[#allocation2 + $0x98] sm:$0xff]
          %v2045 = vld [vmem:[#allocation2 + $0xa0] sm:$0xff]
          %v2046 = vld [vmem:[#allocation2 + $0xa8] sm:$0xff]
          %v2047 = vld [vmem:[#allocation2 + $0xb0] sm:$0xff]
          %v2048 = vld [vmem:[#allocation2 + $0xb8] sm:$0xff]
          %v2049 = vld [vmem:[#allocation2 + $0xc0] sm:$0xff]
          %v2050 = vld [vmem:[#allocation2 + $0xc8] sm:$0xff]
          %v2051 = vld [vmem:[#allocation2 + $0xd0] sm:$0xff]
          %v2052 = vld [vmem:[#allocation2 + $0xd8] sm:$0xff]
          %v2053 = vld [vmem:[#allocation2 + $0xe0] sm:$0xff]
          %v2054 = vld [vmem:[#allocation2 + $0xe8] sm:$0xff]
          %v2055 = vld [vmem:[#allocation2 + $0xf0] sm:$0xff]
          %v2056 = vld [vmem:[#allocation2 + $0xf8] sm:$0xff]
          %v2057 = vld [vmem:[#allocation2 + $0x100] sm:$0xff]
          %v2058 = vld [vmem:[#allocation2 + $0x108] sm:$0xff]
          %v2059 = vld [vmem:[#allocation2 + $0x110] sm:$0xff]
          %v2060 = vld [vmem:[#allocation2 + $0x118] sm:$0xff]
          %v2061 = vld [vmem:[#allocation2 + $0x120] sm:$0xff]
          %v2062 = vld [vmem:[#allocation2 + $0x128] sm:$0xff]
          %v2063 = vld [vmem:[#allocation2 + $0x130] sm:$0xff]
          %v2064 = vld [vmem:[#allocation2 + $0x138] sm:$0xff]
          %v2065 = vld [vmem:[#allocation2 + $0x140] sm:$0xff]
          %v2066 = vld [vmem:[#allocation2 + $0x148] sm:$0xff]
          %v2067 = vld [vmem:[#allocation2 + $0x150] sm:$0xff]
          %v2068 = vld [vmem:[#allocation2 + $0x158] sm:$0xff]
          %v2069 = vld [vmem:[#allocation2 + $0x160] sm:$0xff]
          %v2070 = vld [vmem:[#allocation2 + $0x168] sm:$0xff]
          %v2071 = vld [vmem:[#allocation2 + $0x170] sm:$0xff]
          %v2072 = vld [vmem:[#allocation2 + $0x178] sm:$0xff]
          %v2073 = vld [vmem:[#allocation2 + $0x180] sm:$0xff]
          %v2074 = vld [vmem:[#allocation2 + $0x188] sm:$0xff]
          %v2075 = vld [vmem:[#allocation2 + $0x190] sm:$0xff]
          %v2076 = vld [vmem:[#allocation2 + $0x198] sm:$0xff]
          %v2077 = vld [vmem:[#allocation2 + $0x1a0] sm:$0xff]
          %v2078 = vld [vmem:[#allocation2 + $0x1a8] sm:$0xff]
          %v2079 = vld [vmem:[#allocation2 + $0x1b0] sm:$0xff]
          %v2080 = vld [vmem:[#allocation2 + $0x1b8] sm:$0xff]
          %v2081 = vld [vmem:[#allocation2 + $0x1c0] sm:$0xff]
          %v2082 = vld [vmem:[#allocation2 + $0x1c8] sm:$0xff]
          %v2083 = vld [vmem:[#allocation2 + $0x1d0] sm:$0xff]
          %v2084 = vld [vmem:[#allocation2 + $0x1d8] sm:$0xff]
          %v2085 = vld [vmem:[#allocation2 + $0x1e0] sm:$0xff]
          %v2086 = vld [vmem:[#allocation2 + $0x1e8] sm:$0xff]
          %v2087 = vld [vmem:[#allocation2 + $0x1f0] sm:$0xff]
          %v2088 = vld [vmem:[#allocation2 + $0x1f8] sm:$0xff]
          %v2089 = vld [vmem:[%s295] sm:$0x1]
          %v2091 = vlaneseq
          %v2092 = vshrl.u32 %v2091, 7
          %v2093 = vsub.s32 0, %v2092
          %v2094 = vrot.slane %v2089, %v2093
          %v2096 = vmul.f32 %v2025, %v2094
          %v2097 = vmul.f32 %v2026, %v2094
          %v2098 = vmul.f32 %v2027, %v2094
          %v2099 = vmul.f32 %v2028, %v2094
          %v2100 = vmul.f32 %v2029, %v2094
          %v2101 = vmul.f32 %v2030, %v2094
          %v2102 = vmul.f32 %v2031, %v2094
          %v2103 = vmul.f32 %v2032, %v2094
          %v2104 = vmul.f32 %v2033, %v2094
          %v2105 = vmul.f32 %v2034, %v2094
          %v2106 = vmul.f32 %v2035, %v2094
          %v2107 = vmul.f32 %v2036, %v2094
          %v2108 = vmul.f32 %v2037, %v2094
          %v2109 = vmul.f32 %v2038, %v2094
          %v2110 = vmul.f32 %v2039, %v2094
          %v2111 = vmul.f32 %v2040, %v2094
          %v2112 = vmul.f32 %v2041, %v2094
          %v2113 = vmul.f32 %v2042, %v2094
          %v2114 = vmul.f32 %v2043, %v2094
          %v2115 = vmul.f32 %v2044, %v2094
          %v2116 = vmul.f32 %v2045, %v2094
          %v2117 = vmul.f32 %v2046, %v2094
          %v2118 = vmul.f32 %v2047, %v2094
          %v2119 = vmul.f32 %v2048, %v2094
          %v2120 = vmul.f32 %v2049, %v2094
          %v2121 = vmul.f32 %v2050, %v2094
          %v2122 = vmul.f32 %v2051, %v2094
          %v2123 = vmul.f32 %v2052, %v2094
          %v2124 = vmul.f32 %v2053, %v2094
          %v2125 = vmul.f32 %v2054, %v2094
          %v2126 = vmul.f32 %v2055, %v2094
          %v2127 = vmul.f32 %v2056, %v2094
          %v2128 = vmul.f32 %v2057, %v2094
          %v2129 = vmul.f32 %v2058, %v2094
          %v2130 = vmul.f32 %v2059, %v2094
          %v2131 = vmul.f32 %v2060, %v2094
          %v2132 = vmul.f32 %v2061, %v2094
          %v2133 = vmul.f32 %v2062, %v2094
          %v2134 = vmul.f32 %v2063, %v2094
          %v2135 = vmul.f32 %v2064, %v2094
          %v2136 = vmul.f32 %v2065, %v2094
          %v2137 = vmul.f32 %v2066, %v2094
          %v2138 = vmul.f32 %v2067, %v2094
          %v2139 = vmul.f32 %v2068, %v2094
          %v2140 = vmul.f32 %v2069, %v2094
          %v2141 = vmul.f32 %v2070, %v2094
          %v2142 = vmul.f32 %v2071, %v2094
          %v2143 = vmul.f32 %v2072, %v2094
          %v2144 = vmul.f32 %v2073, %v2094
          %v2145 = vmul.f32 %v2074, %v2094
          %v2146 = vmul.f32 %v2075, %v2094
          %v2147 = vmul.f32 %v2076, %v2094
          %v2148 = vmul.f32 %v2077, %v2094
          %v2149 = vmul.f32 %v2078, %v2094
          %v2150 = vmul.f32 %v2079, %v2094
          %v2151 = vmul.f32 %v2080, %v2094
          %v2152 = vmul.f32 %v2081, %v2094
          %v2153 = vmul.f32 %v2082, %v2094
          %v2154 = vmul.f32 %v2083, %v2094
          %v2155 = vmul.f32 %v2084, %v2094
          %v2156 = vmul.f32 %v2085, %v2094
          %v2157 = vmul.f32 %v2086, %v2094
          %v2158 = vmul.f32 %v2087, %v2094
          %v2159 = vmul.f32 %v2088, %v2094
          %v2160 = vld [vmem:[%s298] sm:$0x1]
          %v2162 = vlaneseq
          %v2163 = vshrl.u32 %v2162, 7
          %v2164 = vsub.s32 0, %v2163
          %v2165 = vrot.slane %v2160, %v2164
          %v2167 = vadd.f32 %v2096, %v2165
          %v2168 = vadd.f32 %v2097, %v2165
          %v2169 = vadd.f32 %v2098, %v2165
          %v2170 = vadd.f32 %v2099, %v2165
          %v2171 = vadd.f32 %v2100, %v2165
          %v2172 = vadd.f32 %v2101, %v2165
          %v2173 = vadd.f32 %v2102, %v2165
          %v2174 = vadd.f32 %v2103, %v2165
          %v2175 = vadd.f32 %v2104, %v2165
          %v2176 = vadd.f32 %v2105, %v2165
          %v2177 = vadd.f32 %v2106, %v2165
          %v2178 = vadd.f32 %v2107, %v2165
          %v2179 = vadd.f32 %v2108, %v2165
          %v2180 = vadd.f32 %v2109, %v2165
          %v2181 = vadd.f32 %v2110, %v2165
          %v2182 = vadd.f32 %v2111, %v2165
          %v2183 = vadd.f32 %v2112, %v2165
          %v2184 = vadd.f32 %v2113, %v2165
          %v2185 = vadd.f32 %v2114, %v2165
          %v2186 = vadd.f32 %v2115, %v2165
          %v2187 = vadd.f32 %v2116, %v2165
          %v2188 = vadd.f32 %v2117, %v2165
          %v2189 = vadd.f32 %v2118, %v2165
          %v2190 = vadd.f32 %v2119, %v2165
          %v2191 = vadd.f32 %v2120, %v2165
          %v2192 = vadd.f32 %v2121, %v2165
          %v2193 = vadd.f32 %v2122, %v2165
          %v2194 = vadd.f32 %v2123, %v2165
          %v2195 = vadd.f32 %v2124, %v2165
          %v2196 = vadd.f32 %v2125, %v2165
          %v2197 = vadd.f32 %v2126, %v2165
          %v2198 = vadd.f32 %v2127, %v2165
          %v2199 = vadd.f32 %v2128, %v2165
          %v2200 = vadd.f32 %v2129, %v2165
          %v2201 = vadd.f32 %v2130, %v2165
          %v2202 = vadd.f32 %v2131, %v2165
          %v2203 = vadd.f32 %v2132, %v2165
          %v2204 = vadd.f32 %v2133, %v2165
          %v2205 = vadd.f32 %v2134, %v2165
          %v2206 = vadd.f32 %v2135, %v2165
          %v2207 = vadd.f32 %v2136, %v2165
          %v2208 = vadd.f32 %v2137, %v2165
          %v2209 = vadd.f32 %v2138, %v2165
          %v2210 = vadd.f32 %v2139, %v2165
          %v2211 = vadd.f32 %v2140, %v2165
          %v2212 = vadd.f32 %v2141, %v2165
          %v2213 = vadd.f32 %v2142, %v2165
          %v2214 = vadd.f32 %v2143, %v2165
          %v2215 = vadd.f32 %v2144, %v2165
          %v2216 = vadd.f32 %v2145, %v2165
          %v2217 = vadd.f32 %v2146, %v2165
          %v2218 = vadd.f32 %v2147, %v2165
          %v2219 = vadd.f32 %v2148, %v2165
          %v2220 = vadd.f32 %v2149, %v2165
          %v2221 = vadd.f32 %v2150, %v2165
          %v2222 = vadd.f32 %v2151, %v2165
          %v2223 = vadd.f32 %v2152, %v2165
          %v2224 = vadd.f32 %v2153, %v2165
          %v2225 = vadd.f32 %v2154, %v2165
          %v2226 = vadd.f32 %v2155, %v2165
          %v2227 = vadd.f32 %v2156, %v2165
          %v2228 = vadd.f32 %v2157, %v2165
          %v2229 = vadd.f32 %v2158, %v2165
          %v2230 = vadd.f32 %v2159, %v2165
          %v2231 = vmax.f32 %v2167, 0.0
          %v2232 = vmax.f32 %v2168, 0.0
          %v2233 = vmax.f32 %v2169, 0.0
          %v2234 = vmax.f32 %v2170, 0.0
          %v2235 = vmax.f32 %v2171, 0.0
          %v2236 = vmax.f32 %v2172, 0.0
          %v2237 = vmax.f32 %v2173, 0.0
          %v2238 = vmax.f32 %v2174, 0.0
          %v2239 = vmax.f32 %v2175, 0.0
          %v2240 = vmax.f32 %v2176, 0.0
          %v2241 = vmax.f32 %v2177, 0.0
          %v2242 = vmax.f32 %v2178, 0.0
          %v2243 = vmax.f32 %v2179, 0.0
          %v2244 = vmax.f32 %v2180, 0.0
          %v2245 = vmax.f32 %v2181, 0.0
          %v2246 = vmax.f32 %v2182, 0.0
          %v2247 = vmax.f32 %v2183, 0.0
          %v2248 = vmax.f32 %v2184, 0.0
          %v2249 = vmax.f32 %v2185, 0.0
          %v2250 = vmax.f32 %v2186, 0.0
          %v2251 = vmax.f32 %v2187, 0.0
          %v2252 = vmax.f32 %v2188, 0.0
          %v2253 = vmax.f32 %v2189, 0.0
          %v2254 = vmax.f32 %v2190, 0.0
          %v2255 = vmax.f32 %v2191, 0.0
          %v2256 = vmax.f32 %v2192, 0.0
          %v2257 = vmax.f32 %v2193, 0.0
          %v2258 = vmax.f32 %v2194, 0.0
          %v2259 = vmax.f32 %v2195, 0.0
          %v2260 = vmax.f32 %v2196, 0.0
          %v2261 = vmax.f32 %v2197, 0.0
          %v2262 = vmax.f32 %v2198, 0.0
          %v2263 = vmax.f32 %v2199, 0.0
          %v2264 = vmax.f32 %v2200, 0.0
          %v2265 = vmax.f32 %v2201, 0.0
          %v2266 = vmax.f32 %v2202, 0.0
          %v2267 = vmax.f32 %v2203, 0.0
          %v2268 = vmax.f32 %v2204, 0.0
          %v2269 = vmax.f32 %v2205, 0.0
          %v2270 = vmax.f32 %v2206, 0.0
          %v2271 = vmax.f32 %v2207, 0.0
          %v2272 = vmax.f32 %v2208, 0.0
          %v2273 = vmax.f32 %v2209, 0.0
          %v2274 = vmax.f32 %v2210, 0.0
          %v2275 = vmax.f32 %v2211, 0.0
          %v2276 = vmax.f32 %v2212, 0.0
          %v2277 = vmax.f32 %v2213, 0.0
          %v2278 = vmax.f32 %v2214, 0.0
          %v2279 = vmax.f32 %v2215, 0.0
          %v2280 = vmax.f32 %v2216, 0.0
          %v2281 = vmax.f32 %v2217, 0.0
          %v2282 = vmax.f32 %v2218, 0.0
          %v2283 = vmax.f32 %v2219, 0.0
          %v2284 = vmax.f32 %v2220, 0.0
          %v2285 = vmax.f32 %v2221, 0.0
          %v2286 = vmax.f32 %v2222, 0.0
          %v2287 = vmax.f32 %v2223, 0.0
          %v2288 = vmax.f32 %v2224, 0.0
          %v2289 = vmax.f32 %v2225, 0.0
          %v2290 = vmax.f32 %v2226, 0.0
          %v2291 = vmax.f32 %v2227, 0.0
          %v2292 = vmax.f32 %v2228, 0.0
          %v2293 = vmax.f32 %v2229, 0.0
          %v2294 = vmax.f32 %v2230, 0.0
          %v2295 = vpack.c.bf16 %v2232, %v2231
          %v2296 = vpack.c.bf16 %v2234, %v2233
          %v2297 = vpack.c.bf16 %v2236, %v2235
          %v2298 = vpack.c.bf16 %v2238, %v2237
          %v2299 = vpack.c.bf16 %v2240, %v2239
          %v2300 = vpack.c.bf16 %v2242, %v2241
          %v2301 = vpack.c.bf16 %v2244, %v2243
          %v2302 = vpack.c.bf16 %v2246, %v2245
          %v2303 = vpack.c.bf16 %v2248, %v2247
          %v2304 = vpack.c.bf16 %v2250, %v2249
          %v2305 = vpack.c.bf16 %v2252, %v2251
          %v2306 = vpack.c.bf16 %v2254, %v2253
          %v2307 = vpack.c.bf16 %v2256, %v2255
          %v2308 = vpack.c.bf16 %v2258, %v2257
          %v2309 = vpack.c.bf16 %v2260, %v2259
          %v2310 = vpack.c.bf16 %v2262, %v2261
          %v2311 = vpack.c.bf16 %v2264, %v2263
          %v2312 = vpack.c.bf16 %v2266, %v2265
          %v2313 = vpack.c.bf16 %v2268, %v2267
          %v2314 = vpack.c.bf16 %v2270, %v2269
          %v2315 = vpack.c.bf16 %v2272, %v2271
          %v2316 = vpack.c.bf16 %v2274, %v2273
          %v2317 = vpack.c.bf16 %v2276, %v2275
          %v2318 = vpack.c.bf16 %v2278, %v2277
          %v2319 = vpack.c.bf16 %v2280, %v2279
          %v2320 = vpack.c.bf16 %v2282, %v2281
          %v2321 = vpack.c.bf16 %v2284, %v2283
          %v2322 = vpack.c.bf16 %v2286, %v2285
          %v2323 = vpack.c.bf16 %v2288, %v2287
          %v2324 = vpack.c.bf16 %v2290, %v2289
          %v2325 = vpack.c.bf16 %v2292, %v2291
          %v2326 = vpack.c.bf16 %v2294, %v2293
          %v2359 = vunpack.c.l.b16 %v2295
          %v2360 = vunpack.c.h.b16 %v2295
          %v2361 = vunpack.c.l.b16 %v2296
          %v2362 = vunpack.c.h.b16 %v2296
          %v2363 = vunpack.c.l.b16 %v2297
          %v2364 = vunpack.c.h.b16 %v2297
          %v2365 = vunpack.c.l.b16 %v2298
          %v2366 = vunpack.c.h.b16 %v2298
          %v2367 = vunpack.c.l.b16 %v2299
          %v2368 = vunpack.c.h.b16 %v2299
          %v2369 = vunpack.c.l.b16 %v2300
          %v2370 = vunpack.c.h.b16 %v2300
          %v2371 = vunpack.c.l.b16 %v2301
          %v2372 = vunpack.c.h.b16 %v2301
          %v2373 = vunpack.c.l.b16 %v2302
          %v2374 = vunpack.c.h.b16 %v2302
          %v2375 = vunpack.c.l.b16 %v2303
          %v2376 = vunpack.c.h.b16 %v2303
          %v2377 = vunpack.c.l.b16 %v2304
          %v2378 = vunpack.c.h.b16 %v2304
          %v2379 = vunpack.c.l.b16 %v2305
          %v2380 = vunpack.c.h.b16 %v2305
          %v2381 = vunpack.c.l.b16 %v2306
          %v2382 = vunpack.c.h.b16 %v2306
          %v2383 = vunpack.c.l.b16 %v2307
          %v2384 = vunpack.c.h.b16 %v2307
          %v2385 = vunpack.c.l.b16 %v2308
          %v2386 = vunpack.c.h.b16 %v2308
          %v2387 = vunpack.c.l.b16 %v2309
          %v2388 = vunpack.c.h.b16 %v2309
          %v2389 = vunpack.c.l.b16 %v2310
          %v2390 = vunpack.c.h.b16 %v2310
          %v2391 = vunpack.c.l.b16 %v2311
          %v2392 = vunpack.c.h.b16 %v2311
          %v2393 = vunpack.c.l.b16 %v2312
          %v2394 = vunpack.c.h.b16 %v2312
          %v2395 = vunpack.c.l.b16 %v2313
          %v2396 = vunpack.c.h.b16 %v2313
          %v2397 = vunpack.c.l.b16 %v2314
          %v2398 = vunpack.c.h.b16 %v2314
          %v2399 = vunpack.c.l.b16 %v2315
          %v2400 = vunpack.c.h.b16 %v2315
          %v2401 = vunpack.c.l.b16 %v2316
          %v2402 = vunpack.c.h.b16 %v2316
          %v2403 = vunpack.c.l.b16 %v2317
          %v2404 = vunpack.c.h.b16 %v2317
          %v2405 = vunpack.c.l.b16 %v2318
          %v2406 = vunpack.c.h.b16 %v2318
          %v2407 = vunpack.c.l.b16 %v2319
          %v2408 = vunpack.c.h.b16 %v2319
          %v2409 = vunpack.c.l.b16 %v2320
          %v2410 = vunpack.c.h.b16 %v2320
          %v2411 = vunpack.c.l.b16 %v2321
          %v2412 = vunpack.c.h.b16 %v2321
          %v2413 = vunpack.c.l.b16 %v2322
          %v2414 = vunpack.c.h.b16 %v2322
          %v2415 = vunpack.c.l.b16 %v2323
          %v2416 = vunpack.c.h.b16 %v2323
          %v2417 = vunpack.c.l.b16 %v2324
          %v2418 = vunpack.c.h.b16 %v2324
          %v2419 = vunpack.c.l.b16 %v2325
          %v2420 = vunpack.c.h.b16 %v2325
          %v2421 = vunpack.c.l.b16 %v2326
          %v2422 = vunpack.c.h.b16 %v2326
          %v2423 = vpack.c.b16 %v2359, %v2359
          %v2424 = vpack.c.b16 %v2360, %v2360
          %v2425 = vpack.c.b16 %v2361, %v2361
          %v2426 = vpack.c.b16 %v2362, %v2362
          %v2427 = vpack.c.b16 %v2363, %v2363
          %v2428 = vpack.c.b16 %v2364, %v2364
          %v2429 = vpack.c.b16 %v2365, %v2365
          %v2430 = vpack.c.b16 %v2366, %v2366
          %v2431 = vpack.c.b16 %v2367, %v2367
          %v2432 = vpack.c.b16 %v2368, %v2368
          %v2433 = vpack.c.b16 %v2369, %v2369
          %v2434 = vpack.c.b16 %v2370, %v2370
          %v2435 = vpack.c.b16 %v2371, %v2371
          %v2436 = vpack.c.b16 %v2372, %v2372
          %v2437 = vpack.c.b16 %v2373, %v2373
          %v2438 = vpack.c.b16 %v2374, %v2374
          %v2439 = vpack.c.b16 %v2375, %v2375
          %v2440 = vpack.c.b16 %v2376, %v2376
          %v2441 = vpack.c.b16 %v2377, %v2377
          %v2442 = vpack.c.b16 %v2378, %v2378
          %v2443 = vpack.c.b16 %v2379, %v2379
          %v2444 = vpack.c.b16 %v2380, %v2380
          %v2445 = vpack.c.b16 %v2381, %v2381
          %v2446 = vpack.c.b16 %v2382, %v2382
          %v2447 = vpack.c.b16 %v2383, %v2383
          %v2448 = vpack.c.b16 %v2384, %v2384
          %v2449 = vpack.c.b16 %v2385, %v2385
          %v2450 = vpack.c.b16 %v2386, %v2386
          %v2451 = vpack.c.b16 %v2387, %v2387
          %v2452 = vpack.c.b16 %v2388, %v2388
          %v2453 = vpack.c.b16 %v2389, %v2389
          %v2454 = vpack.c.b16 %v2390, %v2390
          %v2455 = vpack.c.b16 %v2391, %v2391
          %v2456 = vpack.c.b16 %v2392, %v2392
          %v2457 = vpack.c.b16 %v2393, %v2393
          %v2458 = vpack.c.b16 %v2394, %v2394
          %v2459 = vpack.c.b16 %v2395, %v2395
          %v2460 = vpack.c.b16 %v2396, %v2396
          %v2461 = vpack.c.b16 %v2397, %v2397
          %v2462 = vpack.c.b16 %v2398, %v2398
          %v2463 = vpack.c.b16 %v2399, %v2399
          %v2464 = vpack.c.b16 %v2400, %v2400
          %v2465 = vpack.c.b16 %v2401, %v2401
          %v2466 = vpack.c.b16 %v2402, %v2402
          %v2467 = vpack.c.b16 %v2403, %v2403
          %v2468 = vpack.c.b16 %v2404, %v2404
          %v2469 = vpack.c.b16 %v2405, %v2405
          %v2470 = vpack.c.b16 %v2406, %v2406
          %v2471 = vpack.c.b16 %v2407, %v2407
          %v2472 = vpack.c.b16 %v2408, %v2408
          %v2473 = vpack.c.b16 %v2409, %v2409
          %v2474 = vpack.c.b16 %v2410, %v2410
          %v2475 = vpack.c.b16 %v2411, %v2411
          %v2476 = vpack.c.b16 %v2412, %v2412
          %v2477 = vpack.c.b16 %v2413, %v2413
          %v2478 = vpack.c.b16 %v2414, %v2414
          %v2479 = vpack.c.b16 %v2415, %v2415
          %v2480 = vpack.c.b16 %v2416, %v2416
          %v2481 = vpack.c.b16 %v2417, %v2417
          %v2482 = vpack.c.b16 %v2418, %v2418
          %v2483 = vpack.c.b16 %v2419, %v2419
          %v2484 = vpack.c.b16 %v2420, %v2420
          %v2485 = vpack.c.b16 %v2421, %v2421
          %v2486 = vpack.c.b16 %v2422, %v2422
          %vm2551 = vcmask 519168
          %2552 = vst.msk [vmem:[%s271] sm:$0xf] %vm2551, %v2423
          %2553 = vst.msk [vmem:[%s271 + $0x4] sm:$0xf] %vm2551, %v2424
          %2554 = vst.msk [vmem:[%s271 + $0x8] sm:$0xf] %vm2551, %v2425
          %2555 = vst.msk [vmem:[%s271 + $0xc] sm:$0xf] %vm2551, %v2426
          %2556 = vst.msk [vmem:[%s271 + $0x10] sm:$0xf] %vm2551, %v2427
          %2557 = vst.msk [vmem:[%s271 + $0x14] sm:$0xf] %vm2551, %v2428
          %2558 = vst.msk [vmem:[%s271 + $0x18] sm:$0xf] %vm2551, %v2429
          %2559 = vst.msk [vmem:[%s271 + $0x1c] sm:$0xf] %vm2551, %v2430
          %2560 = vst.msk [vmem:[%s271 + $0x20] sm:$0xf] %vm2551, %v2431
          %2561 = vst.msk [vmem:[%s271 + $0x24] sm:$0xf] %vm2551, %v2432
          %2562 = vst.msk [vmem:[%s271 + $0x28] sm:$0xf] %vm2551, %v2433
          %2563 = vst.msk [vmem:[%s271 + $0x2c] sm:$0xf] %vm2551, %v2434
          %2564 = vst.msk [vmem:[%s271 + $0x30] sm:$0xf] %vm2551, %v2435
          %2565 = vst.msk [vmem:[%s271 + $0x34] sm:$0xf] %vm2551, %v2436
          %2566 = vst.msk [vmem:[%s271 + $0x38] sm:$0xf] %vm2551, %v2437
          %2567 = vst.msk [vmem:[%s271 + $0x3c] sm:$0xf] %vm2551, %v2438
          %2568 = vst.msk [vmem:[%s271 + $0x40] sm:$0xf] %vm2551, %v2439
          %2569 = vst.msk [vmem:[%s271 + $0x44] sm:$0xf] %vm2551, %v2440
          %2570 = vst.msk [vmem:[%s271 + $0x48] sm:$0xf] %vm2551, %v2441
          %2571 = vst.msk [vmem:[%s271 + $0x4c] sm:$0xf] %vm2551, %v2442
          %2572 = vst.msk [vmem:[%s271 + $0x50] sm:$0xf] %vm2551, %v2443
          %2573 = vst.msk [vmem:[%s271 + $0x54] sm:$0xf] %vm2551, %v2444
          %2574 = vst.msk [vmem:[%s271 + $0x58] sm:$0xf] %vm2551, %v2445
          %2575 = vst.msk [vmem:[%s271 + $0x5c] sm:$0xf] %vm2551, %v2446
          %2576 = vst.msk [vmem:[%s271 + $0x60] sm:$0xf] %vm2551, %v2447
          %2577 = vst.msk [vmem:[%s271 + $0x64] sm:$0xf] %vm2551, %v2448
          %2578 = vst.msk [vmem:[%s271 + $0x68] sm:$0xf] %vm2551, %v2449
          %2579 = vst.msk [vmem:[%s271 + $0x6c] sm:$0xf] %vm2551, %v2450
          %2580 = vst.msk [vmem:[%s271 + $0x70] sm:$0xf] %vm2551, %v2451
          %2581 = vst.msk [vmem:[%s271 + $0x74] sm:$0xf] %vm2551, %v2452
          %2582 = vst.msk [vmem:[%s271 + $0x78] sm:$0xf] %vm2551, %v2453
          %2583 = vst.msk [vmem:[%s271 + $0x7c] sm:$0xf] %vm2551, %v2454
          %2584 = vst.msk [vmem:[%s271 + $0x80] sm:$0xf] %vm2551, %v2455
          %2585 = vst.msk [vmem:[%s271 + $0x84] sm:$0xf] %vm2551, %v2456
          %2586 = vst.msk [vmem:[%s271 + $0x88] sm:$0xf] %vm2551, %v2457
          %2587 = vst.msk [vmem:[%s271 + $0x8c] sm:$0xf] %vm2551, %v2458
          %2588 = vst.msk [vmem:[%s271 + $0x90] sm:$0xf] %vm2551, %v2459
          %2589 = vst.msk [vmem:[%s271 + $0x94] sm:$0xf] %vm2551, %v2460
          %2590 = vst.msk [vmem:[%s271 + $0x98] sm:$0xf] %vm2551, %v2461
          %2591 = vst.msk [vmem:[%s271 + $0x9c] sm:$0xf] %vm2551, %v2462
          %2592 = vst.msk [vmem:[%s271 + $0xa0] sm:$0xf] %vm2551, %v2463
          %2593 = vst.msk [vmem:[%s271 + $0xa4] sm:$0xf] %vm2551, %v2464
          %2594 = vst.msk [vmem:[%s271 + $0xa8] sm:$0xf] %vm2551, %v2465
          %2595 = vst.msk [vmem:[%s271 + $0xac] sm:$0xf] %vm2551, %v2466
          %2596 = vst.msk [vmem:[%s271 + $0xb0] sm:$0xf] %vm2551, %v2467
          %2597 = vst.msk [vmem:[%s271 + $0xb4] sm:$0xf] %vm2551, %v2468
          %2598 = vst.msk [vmem:[%s271 + $0xb8] sm:$0xf] %vm2551, %v2469
          %2599 = vst.msk [vmem:[%s271 + $0xbc] sm:$0xf] %vm2551, %v2470
          %2600 = vst.msk [vmem:[%s271 + $0xc0] sm:$0xf] %vm2551, %v2471
          %2601 = vst.msk [vmem:[%s271 + $0xc4] sm:$0xf] %vm2551, %v2472
          %2602 = vst.msk [vmem:[%s271 + $0xc8] sm:$0xf] %vm2551, %v2473
          %2603 = vst.msk [vmem:[%s271 + $0xcc] sm:$0xf] %vm2551, %v2474
          %2604 = vst.msk [vmem:[%s271 + $0xd0] sm:$0xf] %vm2551, %v2475
          %2605 = vst.msk [vmem:[%s271 + $0xd4] sm:$0xf] %vm2551, %v2476
          %2606 = vst.msk [vmem:[%s271 + $0xd8] sm:$0xf] %vm2551, %v2477
          %2607 = vst.msk [vmem:[%s271 + $0xdc] sm:$0xf] %vm2551, %v2478
          %2608 = vst.msk [vmem:[%s271 + $0xe0] sm:$0xf] %vm2551, %v2479
          %2609 = vst.msk [vmem:[%s271 + $0xe4] sm:$0xf] %vm2551, %v2480
          %2610 = vst.msk [vmem:[%s271 + $0xe8] sm:$0xf] %vm2551, %v2481
          %2611 = vst.msk [vmem:[%s271 + $0xec] sm:$0xf] %vm2551, %v2482
          %2612 = vst.msk [vmem:[%s271 + $0xf0] sm:$0xf] %vm2551, %v2483
          %2613 = vst.msk [vmem:[%s271 + $0xf4] sm:$0xf] %vm2551, %v2484
          %2614 = vst.msk [vmem:[%s271 + $0xf8] sm:$0xf] %vm2551, %v2485
          %2615 = vst.msk [vmem:[%s271 + $0xfc] sm:$0xf] %vm2551, %v2486
        $region44: #{conv3d_im2col_bn_act.1} parent=35 // pred_fallthru
          _
        %s2616 = sand.u32 %s155, 1
        %s2617 = scalar_lea.sflag [#allocation4], %s2616
        %s2618 = sand.u32 %s155, 1
        %s2619 = smul.addr %s2618, 256
        %s2620 = scalar_lea.vmem [#allocation3], %s2619
        // Predicated region
        $region45: #{conv3d_im2col_bn_act.1} parent=35 // pred_check
          %p2621 = pneg %p165
        $region46: #{conv3d_im2col_bn_act.1} parent=35 // pred_check_branch
          %2623 = sbr.rel (%p2621) target = $region48
        $region47: #{conv3d_im2col_bn_act.1} parent=35 // pred_region
          %s2624 = smul.u32 64, %s23
          %s2626 = ssub.s32 4096, 4096
          %2627 = vsyncadd %s2617, %s2626
          %s2628 = sadd.s32 %s24, %s2624
          %s2629 = smul.addr %s2628, 64
          %s2630 = scalar_lea.hbm %s4, %s2629
          %s2631 = sshll.u32 %s2620, 4
          %s2632 = int_to_ptr.vmem [resolvable:$true] %s2631
          %2637 = dma.vmem_to_hbm [thread:$0]  %s2632, 4096, %s2630, %s2617, 64, 64, 4
        $region48: #{conv3d_im2col_bn_act.1} parent=35 // pred_fallthru
          _
      $region36: #{conv3d_im2col_bn_act.1} parent=5 // pred_fallthru
        _
      %p2638 = scmp.le.s32.totalorder 2, %s13
      // Predicated region
      $region49: #{conv3d_im2col_bn_act.1} parent=5 // pred_check
        %p2639 = pneg %p2638
      $region50: #{conv3d_im2col_bn_act.1} parent=5 // pred_check_branch
        %2641 = sbr.rel (%p2639) target = $region52
      $region51: #{conv3d_im2col_bn_act.1} parent=5 // pred_region
        %s2642 = ssub.s32 %s13, 2
        // Predicated region
        $region53: #{conv3d_im2col_bn_act.1} parent=51 // pred_check
          %p2643 = pneg %p171
        $region54: #{conv3d_im2col_bn_act.1} parent=51 // pred_check_branch
          %2645 = sbr.rel (%p2643) target = $region56
        $region55: #{conv3d_im2col_bn_act.1} parent=51 // pred_region
          %s2646 = sand.u32 %s156, 1
          %s2647 = scalar_lea.sflag [#allocation4], %s2646
          %s2648 = sand.u32 %s156, 1
          %s2649 = smul.addr %s2648, 256
          %s2650 = scalar_lea.vmem [#allocation3], %s2649
          %2651 = dma.done %s2647, 4096
        $region56: #{conv3d_im2col_bn_act.1} parent=51 // pred_fallthru
          _
      $region52: #{conv3d_im2col_bn_act.1} parent=5 // pred_fallthru
        _
    $region6: #{conv3d_im2col_bn_act.1} parent=1 // loop_footer
      %s17 = sadd.s32 1, %s13
    $region7: #{conv3d_im2col_bn_act.1} parent=1 // loop_footer_branch
      %12 = sbr.rel target = $region3
    $region8: #{conv3d_im2col_bn_act.1} parent=1 // loop_exit
      _
    %2652 = vsyncpa [#allocation4], 1
    %s2653 = scalar_lea.sflag [#allocation4], 1
    %2654 = vsyncpa %s2653, 1

</llo_original>
